<compile_context>
chip_gen: v6e
topology: v6e:2x2x1
jax: 0.10.0
libtpu: 0.0.40
codegen_flags: <defaults>
</compile_context>

<pallas_src>
import jax
import jax.numpy as jnp
from jax.experimental import pallas as pl
from jax.experimental.pallas import tpu as pltpu


# ---------------------------------------------------------------------------
# Fused kernel: num_layers LSTM layers + final Linear, single invocation.
# Ref order: x2d, (wih_t, whh_t, bias) * L, wfc_t, bfc, out, hseq scratch(es)
# ---------------------------------------------------------------------------
def _make_fused_kernel(num_layers, T, B, H):
    n_buf = 2 if num_layers > 1 else 1   # ping-pong hidden-sequence buffers

    def kernel(*refs):
        x_ref = refs[0]
        pos = 1
        layer_refs = []
        for _ in range(num_layers):
            layer_refs.append(refs[pos:pos + 3])
            pos += 3
        wfc_ref = refs[pos]
        bfc_ref = refs[pos + 1]
        o_ref = refs[pos + 2]
        hseq = refs[pos + 3: pos + 3 + n_buf]

        layer_in = x_ref[...]                               # (T*B, D_in) f32
        for l in range(num_layers):
            wih_ref, whh_ref, b_ref = layer_refs[l]

            # Hoisted input projection for the whole sequence: one big MXU
            # matmul instead of T tiny 2-row pushes inside the recurrence.
            zx = (jnp.dot(layer_in, wih_ref[...],
                          preferred_element_type=jnp.float32)
                  + b_ref[...])                             # (T*B, 4H)

            whh = whh_ref[...]                              # (H, 4H)
            hseq_ref = hseq[l % n_buf]

            h = jnp.zeros((B, H), jnp.float32)
            c = jnp.zeros((B, H), jnp.float32)
            # Sequential recurrence, fully unrolled at trace time (T static,
            # small) -- no per-step grid launches, all VMEM-resident.
            for t in range(T):
                z = zx[t * B:(t + 1) * B, :] + jnp.dot(
                    h, whh, preferred_element_type=jnp.float32)   # (B, 4H)
                # Gates reordered by the wrapper to [i, f, o, g]:
                s = jax.nn.sigmoid(z[:, :3 * H])            # i | f | o
                g = jnp.tanh(z[:, 3 * H:])                  # g
                i_g = s[:, :H]
                f_g = s[:, H:2 * H]
                o_g = s[:, 2 * H:]
                c = f_g * c + i_g * g
                h = o_g * jnp.tanh(c)
                hseq_ref[t * B:(t + 1) * B, :] = h
            layer_in = hseq_ref[...]                        # (T*B, H)

        # Final Linear on every timestep, fused into the same kernel.
        o_ref[...] = (jnp.dot(layer_in, wfc_ref[...],
                              preferred_element_type=jnp.float32)
                      + bfc_ref[...])                       # (T*B, C)

    return kernel, n_buf


def _reorder_gates(w, H):
    """PyTorch gate order [i, f, g, o] -> [i, f, o, g] along axis 0."""
    return jnp.concatenate([w[:2 * H], w[3 * H:4 * H], w[2 * H:3 * H]], axis=0)


# ---------------------------------------------------------------------------
# Full model: x (B, T, input_size) -> logits (B, T, num_classes)
# ---------------------------------------------------------------------------
@jax.jit
def lstm_classifier_forward(x, lstm_params, w_fc, b_fc):
    B, T, D = x.shape
    H = lstm_params[0][1].shape[1]
    C = w_fc.shape[0]
    num_layers = len(lstm_params)

    # Time-major flatten: row t*B + b <-> (batch b, time t), so each
    # timestep's rows of the hoisted projection are contiguous sublanes.
    x2d = jnp.transpose(x, (1, 0, 2)).reshape(T * B, D)

    inputs = [x2d]
    for (w_ih, w_hh, b_ih, b_hh) in lstm_params:
        inputs.append(jnp.transpose(_reorder_gates(w_ih, H)))          # (D_in, 4H)
        inputs.append(jnp.transpose(_reorder_gates(w_hh, H)))          # (H, 4H)
        inputs.append(_reorder_gates(b_ih + b_hh, H).reshape(1, 4 * H))
    inputs.append(jnp.transpose(w_fc))                                  # (H, C)
    inputs.append(b_fc.reshape(1, C))                                   # (1, C)

    kernel, n_buf = _make_fused_kernel(num_layers, T, B, H)

    out2d = pl.pallas_call(
        kernel,
        out_shape=jax.ShapeDtypeStruct((T * B, C), jnp.float32),
        in_specs=[pl.BlockSpec(memory_space=pltpu.MemorySpace.VMEM)
                  for _ in inputs],
        out_specs=pl.BlockSpec(memory_space=pltpu.MemorySpace.VMEM),
        scratch_shapes=[pltpu.VMEM((T * B, H), jnp.float32)
                        for _ in range(n_buf)],
    )(*inputs)

    return jnp.transpose(out2d.reshape(T, B, C), (1, 0, 2))             # (B, T, C)


# ---------------------------------------------------------------------------
# Pure-JAX reference (matches PyTorch nn.LSTM + nn.Linear semantics)
# ---------------------------------------------------------------------------
def _reference(x, lstm_params, w_fc, b_fc):
    B, T, _ = x.shape
    layer_in = x
    for (w_ih, w_hh, b_ih, b_hh) in lstm_params:
        H = w_hh.shape[1]
        h = jnp.zeros((B, H), jnp.float32)
        c = jnp.zeros((B, H), jnp.float32)
        outs = []
        for t in range(T):
            z = layer_in[:, t] @ w_ih.T + b_ih + h @ w_hh.T + b_hh
            i = jax.nn.sigmoid(z[:, :H])
            f = jax.nn.sigmoid(z[:, H:2 * H])
            g = jnp.tanh(z[:, 2 * H:3 * H])
            o = jax.nn.sigmoid(z[:, 3 * H:])
            c = f * c + i * g
            h = o * jnp.tanh(c)
            outs.append(h)
        layer_in = jnp.stack(outs, axis=1)
    return layer_in @ w_fc.T + b_fc


if __name__ == "__main__":
    # Small shapes consistent with the module's forward.
    B, T = 2, 8
    input_size, hidden_size, num_layers, num_classes = 16, 32, 2, 8

    key = jax.random.PRNGKey(0)
    keys = iter(jax.random.split(key, 4 * num_layers + 3))

    bound = 1.0 / (hidden_size ** 0.5)   # PyTorch-style uniform init
    lstm_params = []
    for layer in range(num_layers):
        d_in = input_size if layer == 0 else hidden_size
        w_ih = jax.random.uniform(next(keys), (4 * hidden_size, d_in),
                                  jnp.float32, -bound, bound)
        w_hh = jax.random.uniform(next(keys), (4 * hidden_size, hidden_size),
                                  jnp.float32, -bound, bound)
        b_ih = jax.random.uniform(next(keys), (4 * hidden_size,),
                                  jnp.float32, -bound, bound)
        b_hh = jax.random.uniform(next(keys), (4 * hidden_size,),
                                  jnp.float32, -bound, bound)
        lstm_params.append((w_ih, w_hh, b_ih, b_hh))

    w_fc = jax.random.uniform(next(keys), (num_classes, hidden_size),
                              jnp.float32, -bound, bound)
    b_fc = jax.random.uniform(next(keys), (num_classes,),
                              jnp.float32, -bound, bound)

    x = jax.random.normal(next(keys), (B, T, input_size), jnp.float32)

    out = lstm_classifier_forward(x, lstm_params, w_fc, b_fc)
    out = jax.block_until_ready(out)

    ref = _reference(x, lstm_params, w_fc, b_fc)
    assert out.shape == (B, T, num_classes), out.shape
    assert jnp.allclose(out, ref, atol=1e-5, rtol=1e-5), \
        float(jnp.max(jnp.abs(out - ref)))

    print("KERNEL_OK")
</pallas_src>

<mosaic_0001>
module attributes {stable_mosaic.version = 11 : i64} {
  func.func @kernel(%arg0: memref<16x16xf32, #tpu.memory_space<vmem>>, %arg1: memref<16x128xf32, #tpu.memory_space<vmem>>, %arg2: memref<32x128xf32, #tpu.memory_space<vmem>>, %arg3: memref<1x128xf32, #tpu.memory_space<vmem>>, %arg4: memref<32x128xf32, #tpu.memory_space<vmem>>, %arg5: memref<32x128xf32, #tpu.memory_space<vmem>>, %arg6: memref<1x128xf32, #tpu.memory_space<vmem>>, %arg7: memref<32x8xf32, #tpu.memory_space<vmem>>, %arg8: memref<1x8xf32, #tpu.memory_space<vmem>>, %arg9: memref<16x8xf32, #tpu.memory_space<vmem>>, %arg10: memref<16x32xf32, #tpu.memory_space<vmem>>, %arg11: memref<16x32xf32, #tpu.memory_space<vmem>>) attributes {dimension_semantics = [], scalar_prefetch = 0 : i64, scratch_operands = 2 : i64, tpu.core_type = #tpu.core_type<tc>} {
    %c0 = arith.constant 0 : index
    %c0_0 = arith.constant 0 : index
    %0 = vector.load %arg0[%c0, %c0_0] : memref<16x16xf32, #tpu.memory_space<vmem>>, vector<16x16xf32>
    %c0_1 = arith.constant 0 : index
    %c0_2 = arith.constant 0 : index
    %1 = vector.load %arg1[%c0_1, %c0_2] : memref<16x128xf32, #tpu.memory_space<vmem>>, vector<16x128xf32>
    %cst = arith.constant dense<0.000000e+00> : vector<16x128xf32>
    %2 = tpu.matmul %0, %1, %cst {dimension_numbers = #tpu.dot_dimension_numbers<[1], [0], [0], [1], [0, 0, 1, 1], [], []>} : vector<16x16xf32>, vector<16x128xf32>, vector<16x128xf32> -> vector<16x128xf32>
    %c0_3 = arith.constant 0 : index
    %c0_4 = arith.constant 0 : index
    %3 = vector.load %arg3[%c0_3, %c0_4] : memref<1x128xf32, #tpu.memory_space<vmem>>, vector<1x128xf32>
    %4 = vector.broadcast %3 : vector<1x128xf32> to vector<16x128xf32>
    %5 = arith.addf %2, %4 : vector<16x128xf32>
    %c0_5 = arith.constant 0 : index
    %c0_6 = arith.constant 0 : index
    %6 = vector.load %arg2[%c0_5, %c0_6] : memref<32x128xf32, #tpu.memory_space<vmem>>, vector<32x128xf32>
    %cst_7 = arith.constant 0.000000e+00 : f32
    %7 = vector.broadcast %cst_7 : f32 to vector<2x32xf32>
    %cst_8 = arith.constant 0.000000e+00 : f32
    %8 = vector.broadcast %cst_8 : f32 to vector<2x32xf32>
    %9 = vector.extract_strided_slice %5 {offsets = [0, 0], sizes = [2, 128], strides = [1, 1]} : vector<16x128xf32> to vector<2x128xf32>
    %cst_9 = arith.constant dense<0.000000e+00> : vector<2x128xf32>
    %10 = tpu.matmul %7, %6, %cst_9 {dimension_numbers = #tpu.dot_dimension_numbers<[1], [0], [0], [1], [0, 0, 1, 1], [], []>} : vector<2x32xf32>, vector<32x128xf32>, vector<2x128xf32> -> vector<2x128xf32>
    %11 = arith.addf %9, %10 : vector<2x128xf32>
    %12 = vector.extract_strided_slice %11 {offsets = [0, 0], sizes = [2, 96], strides = [1, 1]} : vector<2x128xf32> to vector<2x96xf32>
    %13 = arith.negf %12 : vector<2x96xf32>
    %14 = math.exp %13 : vector<2x96xf32>
    %cst_10 = arith.constant 1.000000e+00 : f32
    %15 = vector.broadcast %cst_10 : f32 to vector<2x96xf32>
    %16 = arith.addf %15, %14 : vector<2x96xf32>
    %17 = arith.divf %15, %16 : vector<2x96xf32>
    %18 = vector.extract_strided_slice %11 {offsets = [0, 96], sizes = [2, 32], strides = [1, 1]} : vector<2x128xf32> to vector<2x32xf32>
    %19 = math.tanh %18 : vector<2x32xf32>
    %20 = vector.extract_strided_slice %17 {offsets = [0, 0], sizes = [2, 32], strides = [1, 1]} : vector<2x96xf32> to vector<2x32xf32>
    %21 = vector.extract_strided_slice %17 {offsets = [0, 32], sizes = [2, 32], strides = [1, 1]} : vector<2x96xf32> to vector<2x32xf32>
    %22 = vector.extract_strided_slice %17 {offsets = [0, 64], sizes = [2, 32], strides = [1, 1]} : vector<2x96xf32> to vector<2x32xf32>
    %23 = arith.mulf %21, %8 : vector<2x32xf32>
    %24 = arith.mulf %20, %19 : vector<2x32xf32>
    %25 = arith.addf %23, %24 : vector<2x32xf32>
    %26 = math.tanh %25 : vector<2x32xf32>
    %27 = arith.mulf %22, %26 : vector<2x32xf32>
    %c0_11 = arith.constant 0 : index
    %c0_12 = arith.constant 0 : index
    %28 = vector.load %arg10[%c0_11, %c0_12] : memref<16x32xf32, #tpu.memory_space<vmem>>, vector<2x32xf32>
    tpu.vector_store %arg10[%c0_11, %c0_12], %27 {strides = array<i32>} : memref<16x32xf32, #tpu.memory_space<vmem>>, vector<2x32xf32>,
    %29 = vector.extract_strided_slice %5 {offsets = [2, 0], sizes = [2, 128], strides = [1, 1]} : vector<16x128xf32> to vector<2x128xf32>
    %cst_13 = arith.constant dense<0.000000e+00> : vector<2x128xf32>
    %30 = tpu.matmul %27, %6, %cst_13 {dimension_numbers = #tpu.dot_dimension_numbers<[1], [0], [0], [1], [0, 0, 1, 1], [], []>} : vector<2x32xf32>, vector<32x128xf32>, vector<2x128xf32> -> vector<2x128xf32>
    %31 = arith.addf %29, %30 : vector<2x128xf32>
    %32 = vector.extract_strided_slice %31 {offsets = [0, 0], sizes = [2, 96], strides = [1, 1]} : vector<2x128xf32> to vector<2x96xf32>
    %33 = arith.negf %32 : vector<2x96xf32>
    %34 = math.exp %33 : vector<2x96xf32>
    %cst_14 = arith.constant 1.000000e+00 : f32
    %35 = vector.broadcast %cst_14 : f32 to vector<2x96xf32>
    %36 = arith.addf %35, %34 : vector<2x96xf32>
    %37 = arith.divf %35, %36 : vector<2x96xf32>
    %38 = vector.extract_strided_slice %31 {offsets = [0, 96], sizes = [2, 32], strides = [1, 1]} : vector<2x128xf32> to vector<2x32xf32>
    %39 = math.tanh %38 : vector<2x32xf32>
    %40 = vector.extract_strided_slice %37 {offsets = [0, 0], sizes = [2, 32], strides = [1, 1]} : vector<2x96xf32> to vector<2x32xf32>
    %41 = vector.extract_strided_slice %37 {offsets = [0, 32], sizes = [2, 32], strides = [1, 1]} : vector<2x96xf32> to vector<2x32xf32>
    %42 = vector.extract_strided_slice %37 {offsets = [0, 64], sizes = [2, 32], strides = [1, 1]} : vector<2x96xf32> to vector<2x32xf32>
    %43 = arith.mulf %41, %25 : vector<2x32xf32>
    %44 = arith.mulf %40, %39 : vector<2x32xf32>
    %45 = arith.addf %43, %44 : vector<2x32xf32>
    %46 = math.tanh %45 : vector<2x32xf32>
    %47 = arith.mulf %42, %46 : vector<2x32xf32>
    %c2 = arith.constant 2 : index
    %c0_15 = arith.constant 0 : index
    %48 = vector.load %arg10[%c2, %c0_15] : memref<16x32xf32, #tpu.memory_space<vmem>>, vector<2x32xf32>
    tpu.vector_store %arg10[%c2, %c0_15], %47 {strides = array<i32>} : memref<16x32xf32, #tpu.memory_space<vmem>>, vector<2x32xf32>,
    %49 = vector.extract_strided_slice %5 {offsets = [4, 0], sizes = [2, 128], strides = [1, 1]} : vector<16x128xf32> to vector<2x128xf32>
    %cst_16 = arith.constant dense<0.000000e+00> : vector<2x128xf32>
    %50 = tpu.matmul %47, %6, %cst_16 {dimension_numbers = #tpu.dot_dimension_numbers<[1], [0], [0], [1], [0, 0, 1, 1], [], []>} : vector<2x32xf32>, vector<32x128xf32>, vector<2x128xf32> -> vector<2x128xf32>
    %51 = arith.addf %49, %50 : vector<2x128xf32>
    %52 = vector.extract_strided_slice %51 {offsets = [0, 0], sizes = [2, 96], strides = [1, 1]} : vector<2x128xf32> to vector<2x96xf32>
    %53 = arith.negf %52 : vector<2x96xf32>
    %54 = math.exp %53 : vector<2x96xf32>
    %cst_17 = arith.constant 1.000000e+00 : f32
    %55 = vector.broadcast %cst_17 : f32 to vector<2x96xf32>
    %56 = arith.addf %55, %54 : vector<2x96xf32>
    %57 = arith.divf %55, %56 : vector<2x96xf32>
    %58 = vector.extract_strided_slice %51 {offsets = [0, 96], sizes = [2, 32], strides = [1, 1]} : vector<2x128xf32> to vector<2x32xf32>
    %59 = math.tanh %58 : vector<2x32xf32>
    %60 = vector.extract_strided_slice %57 {offsets = [0, 0], sizes = [2, 32], strides = [1, 1]} : vector<2x96xf32> to vector<2x32xf32>
    %61 = vector.extract_strided_slice %57 {offsets = [0, 32], sizes = [2, 32], strides = [1, 1]} : vector<2x96xf32> to vector<2x32xf32>
    %62 = vector.extract_strided_slice %57 {offsets = [0, 64], sizes = [2, 32], strides = [1, 1]} : vector<2x96xf32> to vector<2x32xf32>
    %63 = arith.mulf %61, %45 : vector<2x32xf32>
    %64 = arith.mulf %60, %59 : vector<2x32xf32>
    %65 = arith.addf %63, %64 : vector<2x32xf32>
    %66 = math.tanh %65 : vector<2x32xf32>
    %67 = arith.mulf %62, %66 : vector<2x32xf32>
    %c4 = arith.constant 4 : index
    %c0_18 = arith.constant 0 : index
    %68 = vector.load %arg10[%c4, %c0_18] : memref<16x32xf32, #tpu.memory_space<vmem>>, vector<2x32xf32>
    tpu.vector_store %arg10[%c4, %c0_18], %67 {strides = array<i32>} : memref<16x32xf32, #tpu.memory_space<vmem>>, vector<2x32xf32>,
    %69 = vector.extract_strided_slice %5 {offsets = [6, 0], sizes = [2, 128], strides = [1, 1]} : vector<16x128xf32> to vector<2x128xf32>
    %cst_19 = arith.constant dense<0.000000e+00> : vector<2x128xf32>
    %70 = tpu.matmul %67, %6, %cst_19 {dimension_numbers = #tpu.dot_dimension_numbers<[1], [0], [0], [1], [0, 0, 1, 1], [], []>} : vector<2x32xf32>, vector<32x128xf32>, vector<2x128xf32> -> vector<2x128xf32>
    %71 = arith.addf %69, %70 : vector<2x128xf32>
    %72 = vector.extract_strided_slice %71 {offsets = [0, 0], sizes = [2, 96], strides = [1, 1]} : vector<2x128xf32> to vector<2x96xf32>
    %73 = arith.negf %72 : vector<2x96xf32>
    %74 = math.exp %73 : vector<2x96xf32>
    %cst_20 = arith.constant 1.000000e+00 : f32
    %75 = vector.broadcast %cst_20 : f32 to vector<2x96xf32>
    %76 = arith.addf %75, %74 : vector<2x96xf32>
    %77 = arith.divf %75, %76 : vector<2x96xf32>
    %78 = vector.extract_strided_slice %71 {offsets = [0, 96], sizes = [2, 32], strides = [1, 1]} : vector<2x128xf32> to vector<2x32xf32>
    %79 = math.tanh %78 : vector<2x32xf32>
    %80 = vector.extract_strided_slice %77 {offsets = [0, 0], sizes = [2, 32], strides = [1, 1]} : vector<2x96xf32> to vector<2x32xf32>
    %81 = vector.extract_strided_slice %77 {offsets = [0, 32], sizes = [2, 32], strides = [1, 1]} : vector<2x96xf32> to vector<2x32xf32>
    %82 = vector.extract_strided_slice %77 {offsets = [0, 64], sizes = [2, 32], strides = [1, 1]} : vector<2x96xf32> to vector<2x32xf32>
    %83 = arith.mulf %81, %65 : vector<2x32xf32>
    %84 = arith.mulf %80, %79 : vector<2x32xf32>
    %85 = arith.addf %83, %84 : vector<2x32xf32>
    %86 = math.tanh %85 : vector<2x32xf32>
    %87 = arith.mulf %82, %86 : vector<2x32xf32>
    %c6 = arith.constant 6 : index
    %c0_21 = arith.constant 0 : index
    %88 = vector.load %arg10[%c6, %c0_21] : memref<16x32xf32, #tpu.memory_space<vmem>>, vector<2x32xf32>
    tpu.vector_store %arg10[%c6, %c0_21], %87 {strides = array<i32>} : memref<16x32xf32, #tpu.memory_space<vmem>>, vector<2x32xf32>,
    %89 = vector.extract_strided_slice %5 {offsets = [8, 0], sizes = [2, 128], strides = [1, 1]} : vector<16x128xf32> to vector<2x128xf32>
    %cst_22 = arith.constant dense<0.000000e+00> : vector<2x128xf32>
    %90 = tpu.matmul %87, %6, %cst_22 {dimension_numbers = #tpu.dot_dimension_numbers<[1], [0], [0], [1], [0, 0, 1, 1], [], []>} : vector<2x32xf32>, vector<32x128xf32>, vector<2x128xf32> -> vector<2x128xf32>
    %91 = arith.addf %89, %90 : vector<2x128xf32>
    %92 = vector.extract_strided_slice %91 {offsets = [0, 0], sizes = [2, 96], strides = [1, 1]} : vector<2x128xf32> to vector<2x96xf32>
    %93 = arith.negf %92 : vector<2x96xf32>
    %94 = math.exp %93 : vector<2x96xf32>
    %cst_23 = arith.constant 1.000000e+00 : f32
    %95 = vector.broadcast %cst_23 : f32 to vector<2x96xf32>
    %96 = arith.addf %95, %94 : vector<2x96xf32>
    %97 = arith.divf %95, %96 : vector<2x96xf32>
    %98 = vector.extract_strided_slice %91 {offsets = [0, 96], sizes = [2, 32], strides = [1, 1]} : vector<2x128xf32> to vector<2x32xf32>
    %99 = math.tanh %98 : vector<2x32xf32>
    %100 = vector.extract_strided_slice %97 {offsets = [0, 0], sizes = [2, 32], strides = [1, 1]} : vector<2x96xf32> to vector<2x32xf32>
    %101 = vector.extract_strided_slice %97 {offsets = [0, 32], sizes = [2, 32], strides = [1, 1]} : vector<2x96xf32> to vector<2x32xf32>
    %102 = vector.extract_strided_slice %97 {offsets = [0, 64], sizes = [2, 32], strides = [1, 1]} : vector<2x96xf32> to vector<2x32xf32>
    %103 = arith.mulf %101, %85 : vector<2x32xf32>
    %104 = arith.mulf %100, %99 : vector<2x32xf32>
    %105 = arith.addf %103, %104 : vector<2x32xf32>
    %106 = math.tanh %105 : vector<2x32xf32>
    %107 = arith.mulf %102, %106 : vector<2x32xf32>
    %c8 = arith.constant 8 : index
    %c0_24 = arith.constant 0 : index
    %108 = vector.load %arg10[%c8, %c0_24] : memref<16x32xf32, #tpu.memory_space<vmem>>, vector<2x32xf32>
    tpu.vector_store %arg10[%c8, %c0_24], %107 {strides = array<i32>} : memref<16x32xf32, #tpu.memory_space<vmem>>, vector<2x32xf32>,
    %109 = vector.extract_strided_slice %5 {offsets = [10, 0], sizes = [2, 128], strides = [1, 1]} : vector<16x128xf32> to vector<2x128xf32>
    %cst_25 = arith.constant dense<0.000000e+00> : vector<2x128xf32>
    %110 = tpu.matmul %107, %6, %cst_25 {dimension_numbers = #tpu.dot_dimension_numbers<[1], [0], [0], [1], [0, 0, 1, 1], [], []>} : vector<2x32xf32>, vector<32x128xf32>, vector<2x128xf32> -> vector<2x128xf32>
    %111 = arith.addf %109, %110 : vector<2x128xf32>
    %112 = vector.extract_strided_slice %111 {offsets = [0, 0], sizes = [2, 96], strides = [1, 1]} : vector<2x128xf32> to vector<2x96xf32>
    %113 = arith.negf %112 : vector<2x96xf32>
    %114 = math.exp %113 : vector<2x96xf32>
    %cst_26 = arith.constant 1.000000e+00 : f32
    %115 = vector.broadcast %cst_26 : f32 to vector<2x96xf32>
    %116 = arith.addf %115, %114 : vector<2x96xf32>
    %117 = arith.divf %115, %116 : vector<2x96xf32>
    %118 = vector.extract_strided_slice %111 {offsets = [0, 96], sizes = [2, 32], strides = [1, 1]} : vector<2x128xf32> to vector<2x32xf32>
    %119 = math.tanh %118 : vector<2x32xf32>
    %120 = vector.extract_strided_slice %117 {offsets = [0, 0], sizes = [2, 32], strides = [1, 1]} : vector<2x96xf32> to vector<2x32xf32>
    %121 = vector.extract_strided_slice %117 {offsets = [0, 32], sizes = [2, 32], strides = [1, 1]} : vector<2x96xf32> to vector<2x32xf32>
    %122 = vector.extract_strided_slice %117 {offsets = [0, 64], sizes = [2, 32], strides = [1, 1]} : vector<2x96xf32> to vector<2x32xf32>
    %123 = arith.mulf %121, %105 : vector<2x32xf32>
    %124 = arith.mulf %120, %119 : vector<2x32xf32>
    %125 = arith.addf %123, %124 : vector<2x32xf32>
    %126 = math.tanh %125 : vector<2x32xf32>
    %127 = arith.mulf %122, %126 : vector<2x32xf32>
    %c10 = arith.constant 10 : index
    %c0_27 = arith.constant 0 : index
    %128 = vector.load %arg10[%c10, %c0_27] : memref<16x32xf32, #tpu.memory_space<vmem>>, vector<2x32xf32>
    tpu.vector_store %arg10[%c10, %c0_27], %127 {strides = array<i32>} : memref<16x32xf32, #tpu.memory_space<vmem>>, vector<2x32xf32>,
    %129 = vector.extract_strided_slice %5 {offsets = [12, 0], sizes = [2, 128], strides = [1, 1]} : vector<16x128xf32> to vector<2x128xf32>
    %cst_28 = arith.constant dense<0.000000e+00> : vector<2x128xf32>
    %130 = tpu.matmul %127, %6, %cst_28 {dimension_numbers = #tpu.dot_dimension_numbers<[1], [0], [0], [1], [0, 0, 1, 1], [], []>} : vector<2x32xf32>, vector<32x128xf32>, vector<2x128xf32> -> vector<2x128xf32>
    %131 = arith.addf %129, %130 : vector<2x128xf32>
    %132 = vector.extract_strided_slice %131 {offsets = [0, 0], sizes = [2, 96], strides = [1, 1]} : vector<2x128xf32> to vector<2x96xf32>
    %133 = arith.negf %132 : vector<2x96xf32>
    %134 = math.exp %133 : vector<2x96xf32>
    %cst_29 = arith.constant 1.000000e+00 : f32
    %135 = vector.broadcast %cst_29 : f32 to vector<2x96xf32>
    %136 = arith.addf %135, %134 : vector<2x96xf32>
    %137 = arith.divf %135, %136 : vector<2x96xf32>
    %138 = vector.extract_strided_slice %131 {offsets = [0, 96], sizes = [2, 32], strides = [1, 1]} : vector<2x128xf32> to vector<2x32xf32>
    %139 = math.tanh %138 : vector<2x32xf32>
    %140 = vector.extract_strided_slice %137 {offsets = [0, 0], sizes = [2, 32], strides = [1, 1]} : vector<2x96xf32> to vector<2x32xf32>
    %141 = vector.extract_strided_slice %137 {offsets = [0, 32], sizes = [2, 32], strides = [1, 1]} : vector<2x96xf32> to vector<2x32xf32>
    %142 = vector.extract_strided_slice %137 {offsets = [0, 64], sizes = [2, 32], strides = [1, 1]} : vector<2x96xf32> to vector<2x32xf32>
    %143 = arith.mulf %141, %125 : vector<2x32xf32>
    %144 = arith.mulf %140, %139 : vector<2x32xf32>
    %145 = arith.addf %143, %144 : vector<2x32xf32>
    %146 = math.tanh %145 : vector<2x32xf32>
    %147 = arith.mulf %142, %146 : vector<2x32xf32>
    %c12 = arith.constant 12 : index
    %c0_30 = arith.constant 0 : index
    %148 = vector.load %arg10[%c12, %c0_30] : memref<16x32xf32, #tpu.memory_space<vmem>>, vector<2x32xf32>
    tpu.vector_store %arg10[%c12, %c0_30], %147 {strides = array<i32>} : memref<16x32xf32, #tpu.memory_space<vmem>>, vector<2x32xf32>,
    %149 = vector.extract_strided_slice %5 {offsets = [14, 0], sizes = [2, 128], strides = [1, 1]} : vector<16x128xf32> to vector<2x128xf32>
    %cst_31 = arith.constant dense<0.000000e+00> : vector<2x128xf32>
    %150 = tpu.matmul %147, %6, %cst_31 {dimension_numbers = #tpu.dot_dimension_numbers<[1], [0], [0], [1], [0, 0, 1, 1], [], []>} : vector<2x32xf32>, vector<32x128xf32>, vector<2x128xf32> -> vector<2x128xf32>
    %151 = arith.addf %149, %150 : vector<2x128xf32>
    %152 = vector.extract_strided_slice %151 {offsets = [0, 0], sizes = [2, 96], strides = [1, 1]} : vector<2x128xf32> to vector<2x96xf32>
    %153 = arith.negf %152 : vector<2x96xf32>
    %154 = math.exp %153 : vector<2x96xf32>
    %cst_32 = arith.constant 1.000000e+00 : f32
    %155 = vector.broadcast %cst_32 : f32 to vector<2x96xf32>
    %156 = arith.addf %155, %154 : vector<2x96xf32>
    %157 = arith.divf %155, %156 : vector<2x96xf32>
    %158 = vector.extract_strided_slice %151 {offsets = [0, 96], sizes = [2, 32], strides = [1, 1]} : vector<2x128xf32> to vector<2x32xf32>
    %159 = math.tanh %158 : vector<2x32xf32>
    %160 = vector.extract_strided_slice %157 {offsets = [0, 0], sizes = [2, 32], strides = [1, 1]} : vector<2x96xf32> to vector<2x32xf32>
    %161 = vector.extract_strided_slice %157 {offsets = [0, 32], sizes = [2, 32], strides = [1, 1]} : vector<2x96xf32> to vector<2x32xf32>
    %162 = vector.extract_strided_slice %157 {offsets = [0, 64], sizes = [2, 32], strides = [1, 1]} : vector<2x96xf32> to vector<2x32xf32>
    %163 = arith.mulf %161, %145 : vector<2x32xf32>
    %164 = arith.mulf %160, %159 : vector<2x32xf32>
    %165 = arith.addf %163, %164 : vector<2x32xf32>
    %166 = math.tanh %165 : vector<2x32xf32>
    %167 = arith.mulf %162, %166 : vector<2x32xf32>
    %c14 = arith.constant 14 : index
    %c0_33 = arith.constant 0 : index
    %168 = vector.load %arg10[%c14, %c0_33] : memref<16x32xf32, #tpu.memory_space<vmem>>, vector<2x32xf32>
    tpu.vector_store %arg10[%c14, %c0_33], %167 {strides = array<i32>} : memref<16x32xf32, #tpu.memory_space<vmem>>, vector<2x32xf32>,
    %c0_34 = arith.constant 0 : index
    %c0_35 = arith.constant 0 : index
    %169 = vector.load %arg10[%c0_34, %c0_35] : memref<16x32xf32, #tpu.memory_space<vmem>>, vector<16x32xf32>
    %c0_36 = arith.constant 0 : index
    %c0_37 = arith.constant 0 : index
    %170 = vector.load %arg4[%c0_36, %c0_37] : memref<32x128xf32, #tpu.memory_space<vmem>>, vector<32x128xf32>
    %cst_38 = arith.constant dense<0.000000e+00> : vector<16x128xf32>
    %171 = tpu.matmul %169, %170, %cst_38 {dimension_numbers = #tpu.dot_dimension_numbers<[1], [0], [0], [1], [0, 0, 1, 1], [], []>} : vector<16x32xf32>, vector<32x128xf32>, vector<16x128xf32> -> vector<16x128xf32>
    %c0_39 = arith.constant 0 : index
    %c0_40 = arith.constant 0 : index
    %172 = vector.load %arg6[%c0_39, %c0_40] : memref<1x128xf32, #tpu.memory_space<vmem>>, vector<1x128xf32>
    %173 = vector.broadcast %172 : vector<1x128xf32> to vector<16x128xf32>
    %174 = arith.addf %171, %173 : vector<16x128xf32>
    %c0_41 = arith.constant 0 : index
    %c0_42 = arith.constant 0 : index
    %175 = vector.load %arg5[%c0_41, %c0_42] : memref<32x128xf32, #tpu.memory_space<vmem>>, vector<32x128xf32>
    %cst_43 = arith.constant 0.000000e+00 : f32
    %176 = vector.broadcast %cst_43 : f32 to vector<2x32xf32>
    %cst_44 = arith.constant 0.000000e+00 : f32
    %177 = vector.broadcast %cst_44 : f32 to vector<2x32xf32>
    %178 = vector.extract_strided_slice %174 {offsets = [0, 0], sizes = [2, 128], strides = [1, 1]} : vector<16x128xf32> to vector<2x128xf32>
    %cst_45 = arith.constant dense<0.000000e+00> : vector<2x128xf32>
    %179 = tpu.matmul %176, %175, %cst_45 {dimension_numbers = #tpu.dot_dimension_numbers<[1], [0], [0], [1], [0, 0, 1, 1], [], []>} : vector<2x32xf32>, vector<32x128xf32>, vector<2x128xf32> -> vector<2x128xf32>
    %180 = arith.addf %178, %179 : vector<2x128xf32>
    %181 = vector.extract_strided_slice %180 {offsets = [0, 0], sizes = [2, 96], strides = [1, 1]} : vector<2x128xf32> to vector<2x96xf32>
    %182 = arith.negf %181 : vector<2x96xf32>
    %183 = math.exp %182 : vector<2x96xf32>
    %cst_46 = arith.constant 1.000000e+00 : f32
    %184 = vector.broadcast %cst_46 : f32 to vector<2x96xf32>
    %185 = arith.addf %184, %183 : vector<2x96xf32>
    %186 = arith.divf %184, %185 : vector<2x96xf32>
    %187 = vector.extract_strided_slice %180 {offsets = [0, 96], sizes = [2, 32], strides = [1, 1]} : vector<2x128xf32> to vector<2x32xf32>
    %188 = math.tanh %187 : vector<2x32xf32>
    %189 = vector.extract_strided_slice %186 {offsets = [0, 0], sizes = [2, 32], strides = [1, 1]} : vector<2x96xf32> to vector<2x32xf32>
    %190 = vector.extract_strided_slice %186 {offsets = [0, 32], sizes = [2, 32], strides = [1, 1]} : vector<2x96xf32> to vector<2x32xf32>
    %191 = vector.extract_strided_slice %186 {offsets = [0, 64], sizes = [2, 32], strides = [1, 1]} : vector<2x96xf32> to vector<2x32xf32>
    %192 = arith.mulf %190, %177 : vector<2x32xf32>
    %193 = arith.mulf %189, %188 : vector<2x32xf32>
    %194 = arith.addf %192, %193 : vector<2x32xf32>
    %195 = math.tanh %194 : vector<2x32xf32>
    %196 = arith.mulf %191, %195 : vector<2x32xf32>
    %c0_47 = arith.constant 0 : index
    %c0_48 = arith.constant 0 : index
    %197 = vector.load %arg11[%c0_47, %c0_48] : memref<16x32xf32, #tpu.memory_space<vmem>>, vector<2x32xf32>
    tpu.vector_store %arg11[%c0_47, %c0_48], %196 {strides = array<i32>} : memref<16x32xf32, #tpu.memory_space<vmem>>, vector<2x32xf32>,
    %198 = vector.extract_strided_slice %174 {offsets = [2, 0], sizes = [2, 128], strides = [1, 1]} : vector<16x128xf32> to vector<2x128xf32>
    %cst_49 = arith.constant dense<0.000000e+00> : vector<2x128xf32>
    %199 = tpu.matmul %196, %175, %cst_49 {dimension_numbers = #tpu.dot_dimension_numbers<[1], [0], [0], [1], [0, 0, 1, 1], [], []>} : vector<2x32xf32>, vector<32x128xf32>, vector<2x128xf32> -> vector<2x128xf32>
    %200 = arith.addf %198, %199 : vector<2x128xf32>
    %201 = vector.extract_strided_slice %200 {offsets = [0, 0], sizes = [2, 96], strides = [1, 1]} : vector<2x128xf32> to vector<2x96xf32>
    %202 = arith.negf %201 : vector<2x96xf32>
    %203 = math.exp %202 : vector<2x96xf32>
    %cst_50 = arith.constant 1.000000e+00 : f32
    %204 = vector.broadcast %cst_50 : f32 to vector<2x96xf32>
    %205 = arith.addf %204, %203 : vector<2x96xf32>
    %206 = arith.divf %204, %205 : vector<2x96xf32>
    %207 = vector.extract_strided_slice %200 {offsets = [0, 96], sizes = [2, 32], strides = [1, 1]} : vector<2x128xf32> to vector<2x32xf32>
    %208 = math.tanh %207 : vector<2x32xf32>
    %209 = vector.extract_strided_slice %206 {offsets = [0, 0], sizes = [2, 32], strides = [1, 1]} : vector<2x96xf32> to vector<2x32xf32>
    %210 = vector.extract_strided_slice %206 {offsets = [0, 32], sizes = [2, 32], strides = [1, 1]} : vector<2x96xf32> to vector<2x32xf32>
    %211 = vector.extract_strided_slice %206 {offsets = [0, 64], sizes = [2, 32], strides = [1, 1]} : vector<2x96xf32> to vector<2x32xf32>
    %212 = arith.mulf %210, %194 : vector<2x32xf32>
    %213 = arith.mulf %209, %208 : vector<2x32xf32>
    %214 = arith.addf %212, %213 : vector<2x32xf32>
    %215 = math.tanh %214 : vector<2x32xf32>
    %216 = arith.mulf %211, %215 : vector<2x32xf32>
    %c2_51 = arith.constant 2 : index
    %c0_52 = arith.constant 0 : index
    %217 = vector.load %arg11[%c2_51, %c0_52] : memref<16x32xf32, #tpu.memory_space<vmem>>, vector<2x32xf32>
    tpu.vector_store %arg11[%c2_51, %c0_52], %216 {strides = array<i32>} : memref<16x32xf32, #tpu.memory_space<vmem>>, vector<2x32xf32>,
    %218 = vector.extract_strided_slice %174 {offsets = [4, 0], sizes = [2, 128], strides = [1, 1]} : vector<16x128xf32> to vector<2x128xf32>
    %cst_53 = arith.constant dense<0.000000e+00> : vector<2x128xf32>
    %219 = tpu.matmul %216, %175, %cst_53 {dimension_numbers = #tpu.dot_dimension_numbers<[1], [0], [0], [1], [0, 0, 1, 1], [], []>} : vector<2x32xf32>, vector<32x128xf32>, vector<2x128xf32> -> vector<2x128xf32>
    %220 = arith.addf %218, %219 : vector<2x128xf32>
    %221 = vector.extract_strided_slice %220 {offsets = [0, 0], sizes = [2, 96], strides = [1, 1]} : vector<2x128xf32> to vector<2x96xf32>
    %222 = arith.negf %221 : vector<2x96xf32>
    %223 = math.exp %222 : vector<2x96xf32>
    %cst_54 = arith.constant 1.000000e+00 : f32
    %224 = vector.broadcast %cst_54 : f32 to vector<2x96xf32>
    %225 = arith.addf %224, %223 : vector<2x96xf32>
    %226 = arith.divf %224, %225 : vector<2x96xf32>
    %227 = vector.extract_strided_slice %220 {offsets = [0, 96], sizes = [2, 32], strides = [1, 1]} : vector<2x128xf32> to vector<2x32xf32>
    %228 = math.tanh %227 : vector<2x32xf32>
    %229 = vector.extract_strided_slice %226 {offsets = [0, 0], sizes = [2, 32], strides = [1, 1]} : vector<2x96xf32> to vector<2x32xf32>
    %230 = vector.extract_strided_slice %226 {offsets = [0, 32], sizes = [2, 32], strides = [1, 1]} : vector<2x96xf32> to vector<2x32xf32>
    %231 = vector.extract_strided_slice %226 {offsets = [0, 64], sizes = [2, 32], strides = [1, 1]} : vector<2x96xf32> to vector<2x32xf32>
    %232 = arith.mulf %230, %214 : vector<2x32xf32>
    %233 = arith.mulf %229, %228 : vector<2x32xf32>
    %234 = arith.addf %232, %233 : vector<2x32xf32>
    %235 = math.tanh %234 : vector<2x32xf32>
    %236 = arith.mulf %231, %235 : vector<2x32xf32>
    %c4_55 = arith.constant 4 : index
    %c0_56 = arith.constant 0 : index
    %237 = vector.load %arg11[%c4_55, %c0_56] : memref<16x32xf32, #tpu.memory_space<vmem>>, vector<2x32xf32>
    tpu.vector_store %arg11[%c4_55, %c0_56], %236 {strides = array<i32>} : memref<16x32xf32, #tpu.memory_space<vmem>>, vector<2x32xf32>,
    %238 = vector.extract_strided_slice %174 {offsets = [6, 0], sizes = [2, 128], strides = [1, 1]} : vector<16x128xf32> to vector<2x128xf32>
    %cst_57 = arith.constant dense<0.000000e+00> : vector<2x128xf32>
    %239 = tpu.matmul %236, %175, %cst_57 {dimension_numbers = #tpu.dot_dimension_numbers<[1], [0], [0], [1], [0, 0, 1, 1], [], []>} : vector<2x32xf32>, vector<32x128xf32>, vector<2x128xf32> -> vector<2x128xf32>
    %240 = arith.addf %238, %239 : vector<2x128xf32>
    %241 = vector.extract_strided_slice %240 {offsets = [0, 0], sizes = [2, 96], strides = [1, 1]} : vector<2x128xf32> to vector<2x96xf32>
    %242 = arith.negf %241 : vector<2x96xf32>
    %243 = math.exp %242 : vector<2x96xf32>
    %cst_58 = arith.constant 1.000000e+00 : f32
    %244 = vector.broadcast %cst_58 : f32 to vector<2x96xf32>
    %245 = arith.addf %244, %243 : vector<2x96xf32>
    %246 = arith.divf %244, %245 : vector<2x96xf32>
    %247 = vector.extract_strided_slice %240 {offsets = [0, 96], sizes = [2, 32], strides = [1, 1]} : vector<2x128xf32> to vector<2x32xf32>
    %248 = math.tanh %247 : vector<2x32xf32>
    %249 = vector.extract_strided_slice %246 {offsets = [0, 0], sizes = [2, 32], strides = [1, 1]} : vector<2x96xf32> to vector<2x32xf32>
    %250 = vector.extract_strided_slice %246 {offsets = [0, 32], sizes = [2, 32], strides = [1, 1]} : vector<2x96xf32> to vector<2x32xf32>
    %251 = vector.extract_strided_slice %246 {offsets = [0, 64], sizes = [2, 32], strides = [1, 1]} : vector<2x96xf32> to vector<2x32xf32>
    %252 = arith.mulf %250, %234 : vector<2x32xf32>
    %253 = arith.mulf %249, %248 : vector<2x32xf32>
    %254 = arith.addf %252, %253 : vector<2x32xf32>
    %255 = math.tanh %254 : vector<2x32xf32>
    %256 = arith.mulf %251, %255 : vector<2x32xf32>
    %c6_59 = arith.constant 6 : index
    %c0_60 = arith.constant 0 : index
    %257 = vector.load %arg11[%c6_59, %c0_60] : memref<16x32xf32, #tpu.memory_space<vmem>>, vector<2x32xf32>
    tpu.vector_store %arg11[%c6_59, %c0_60], %256 {strides = array<i32>} : memref<16x32xf32, #tpu.memory_space<vmem>>, vector<2x32xf32>,
    %258 = vector.extract_strided_slice %174 {offsets = [8, 0], sizes = [2, 128], strides = [1, 1]} : vector<16x128xf32> to vector<2x128xf32>
    %cst_61 = arith.constant dense<0.000000e+00> : vector<2x128xf32>
    %259 = tpu.matmul %256, %175, %cst_61 {dimension_numbers = #tpu.dot_dimension_numbers<[1], [0], [0], [1], [0, 0, 1, 1], [], []>} : vector<2x32xf32>, vector<32x128xf32>, vector<2x128xf32> -> vector<2x128xf32>
    %260 = arith.addf %258, %259 : vector<2x128xf32>
    %261 = vector.extract_strided_slice %260 {offsets = [0, 0], sizes = [2, 96], strides = [1, 1]} : vector<2x128xf32> to vector<2x96xf32>
    %262 = arith.negf %261 : vector<2x96xf32>
    %263 = math.exp %262 : vector<2x96xf32>
    %cst_62 = arith.constant 1.000000e+00 : f32
    %264 = vector.broadcast %cst_62 : f32 to vector<2x96xf32>
    %265 = arith.addf %264, %263 : vector<2x96xf32>
    %266 = arith.divf %264, %265 : vector<2x96xf32>
    %267 = vector.extract_strided_slice %260 {offsets = [0, 96], sizes = [2, 32], strides = [1, 1]} : vector<2x128xf32> to vector<2x32xf32>
    %268 = math.tanh %267 : vector<2x32xf32>
    %269 = vector.extract_strided_slice %266 {offsets = [0, 0], sizes = [2, 32], strides = [1, 1]} : vector<2x96xf32> to vector<2x32xf32>
    %270 = vector.extract_strided_slice %266 {offsets = [0, 32], sizes = [2, 32], strides = [1, 1]} : vector<2x96xf32> to vector<2x32xf32>
    %271 = vector.extract_strided_slice %266 {offsets = [0, 64], sizes = [2, 32], strides = [1, 1]} : vector<2x96xf32> to vector<2x32xf32>
    %272 = arith.mulf %270, %254 : vector<2x32xf32>
    %273 = arith.mulf %269, %268 : vector<2x32xf32>
    %274 = arith.addf %272, %273 : vector<2x32xf32>
    %275 = math.tanh %274 : vector<2x32xf32>
    %276 = arith.mulf %271, %275 : vector<2x32xf32>
    %c8_63 = arith.constant 8 : index
    %c0_64 = arith.constant 0 : index
    %277 = vector.load %arg11[%c8_63, %c0_64] : memref<16x32xf32, #tpu.memory_space<vmem>>, vector<2x32xf32>
    tpu.vector_store %arg11[%c8_63, %c0_64], %276 {strides = array<i32>} : memref<16x32xf32, #tpu.memory_space<vmem>>, vector<2x32xf32>,
    %278 = vector.extract_strided_slice %174 {offsets = [10, 0], sizes = [2, 128], strides = [1, 1]} : vector<16x128xf32> to vector<2x128xf32>
    %cst_65 = arith.constant dense<0.000000e+00> : vector<2x128xf32>
    %279 = tpu.matmul %276, %175, %cst_65 {dimension_numbers = #tpu.dot_dimension_numbers<[1], [0], [0], [1], [0, 0, 1, 1], [], []>} : vector<2x32xf32>, vector<32x128xf32>, vector<2x128xf32> -> vector<2x128xf32>
    %280 = arith.addf %278, %279 : vector<2x128xf32>
    %281 = vector.extract_strided_slice %280 {offsets = [0, 0], sizes = [2, 96], strides = [1, 1]} : vector<2x128xf32> to vector<2x96xf32>
    %282 = arith.negf %281 : vector<2x96xf32>
    %283 = math.exp %282 : vector<2x96xf32>
    %cst_66 = arith.constant 1.000000e+00 : f32
    %284 = vector.broadcast %cst_66 : f32 to vector<2x96xf32>
    %285 = arith.addf %284, %283 : vector<2x96xf32>
    %286 = arith.divf %284, %285 : vector<2x96xf32>
    %287 = vector.extract_strided_slice %280 {offsets = [0, 96], sizes = [2, 32], strides = [1, 1]} : vector<2x128xf32> to vector<2x32xf32>
    %288 = math.tanh %287 : vector<2x32xf32>
    %289 = vector.extract_strided_slice %286 {offsets = [0, 0], sizes = [2, 32], strides = [1, 1]} : vector<2x96xf32> to vector<2x32xf32>
    %290 = vector.extract_strided_slice %286 {offsets = [0, 32], sizes = [2, 32], strides = [1, 1]} : vector<2x96xf32> to vector<2x32xf32>
    %291 = vector.extract_strided_slice %286 {offsets = [0, 64], sizes = [2, 32], strides = [1, 1]} : vector<2x96xf32> to vector<2x32xf32>
    %292 = arith.mulf %290, %274 : vector<2x32xf32>
    %293 = arith.mulf %289, %288 : vector<2x32xf32>
    %294 = arith.addf %292, %293 : vector<2x32xf32>
    %295 = math.tanh %294 : vector<2x32xf32>
    %296 = arith.mulf %291, %295 : vector<2x32xf32>
    %c10_67 = arith.constant 10 : index
    %c0_68 = arith.constant 0 : index
    %297 = vector.load %arg11[%c10_67, %c0_68] : memref<16x32xf32, #tpu.memory_space<vmem>>, vector<2x32xf32>
    tpu.vector_store %arg11[%c10_67, %c0_68], %296 {strides = array<i32>} : memref<16x32xf32, #tpu.memory_space<vmem>>, vector<2x32xf32>,
    %298 = vector.extract_strided_slice %174 {offsets = [12, 0], sizes = [2, 128], strides = [1, 1]} : vector<16x128xf32> to vector<2x128xf32>
    %cst_69 = arith.constant dense<0.000000e+00> : vector<2x128xf32>
    %299 = tpu.matmul %296, %175, %cst_69 {dimension_numbers = #tpu.dot_dimension_numbers<[1], [0], [0], [1], [0, 0, 1, 1], [], []>} : vector<2x32xf32>, vector<32x128xf32>, vector<2x128xf32> -> vector<2x128xf32>
    %300 = arith.addf %298, %299 : vector<2x128xf32>
    %301 = vector.extract_strided_slice %300 {offsets = [0, 0], sizes = [2, 96], strides = [1, 1]} : vector<2x128xf32> to vector<2x96xf32>
    %302 = arith.negf %301 : vector<2x96xf32>
    %303 = math.exp %302 : vector<2x96xf32>
    %cst_70 = arith.constant 1.000000e+00 : f32
    %304 = vector.broadcast %cst_70 : f32 to vector<2x96xf32>
    %305 = arith.addf %304, %303 : vector<2x96xf32>
    %306 = arith.divf %304, %305 : vector<2x96xf32>
    %307 = vector.extract_strided_slice %300 {offsets = [0, 96], sizes = [2, 32], strides = [1, 1]} : vector<2x128xf32> to vector<2x32xf32>
    %308 = math.tanh %307 : vector<2x32xf32>
    %309 = vector.extract_strided_slice %306 {offsets = [0, 0], sizes = [2, 32], strides = [1, 1]} : vector<2x96xf32> to vector<2x32xf32>
    %310 = vector.extract_strided_slice %306 {offsets = [0, 32], sizes = [2, 32], strides = [1, 1]} : vector<2x96xf32> to vector<2x32xf32>
    %311 = vector.extract_strided_slice %306 {offsets = [0, 64], sizes = [2, 32], strides = [1, 1]} : vector<2x96xf32> to vector<2x32xf32>
    %312 = arith.mulf %310, %294 : vector<2x32xf32>
    %313 = arith.mulf %309, %308 : vector<2x32xf32>
    %314 = arith.addf %312, %313 : vector<2x32xf32>
    %315 = math.tanh %314 : vector<2x32xf32>
    %316 = arith.mulf %311, %315 : vector<2x32xf32>
    %c12_71 = arith.constant 12 : index
    %c0_72 = arith.constant 0 : index
    %317 = vector.load %arg11[%c12_71, %c0_72] : memref<16x32xf32, #tpu.memory_space<vmem>>, vector<2x32xf32>
    tpu.vector_store %arg11[%c12_71, %c0_72], %316 {strides = array<i32>} : memref<16x32xf32, #tpu.memory_space<vmem>>, vector<2x32xf32>,
    %318 = vector.extract_strided_slice %174 {offsets = [14, 0], sizes = [2, 128], strides = [1, 1]} : vector<16x128xf32> to vector<2x128xf32>
    %cst_73 = arith.constant dense<0.000000e+00> : vector<2x128xf32>
    %319 = tpu.matmul %316, %175, %cst_73 {dimension_numbers = #tpu.dot_dimension_numbers<[1], [0], [0], [1], [0, 0, 1, 1], [], []>} : vector<2x32xf32>, vector<32x128xf32>, vector<2x128xf32> -> vector<2x128xf32>
    %320 = arith.addf %318, %319 : vector<2x128xf32>
    %321 = vector.extract_strided_slice %320 {offsets = [0, 0], sizes = [2, 96], strides = [1, 1]} : vector<2x128xf32> to vector<2x96xf32>
    %322 = arith.negf %321 : vector<2x96xf32>
    %323 = math.exp %322 : vector<2x96xf32>
    %cst_74 = arith.constant 1.000000e+00 : f32
    %324 = vector.broadcast %cst_74 : f32 to vector<2x96xf32>
    %325 = arith.addf %324, %323 : vector<2x96xf32>
    %326 = arith.divf %324, %325 : vector<2x96xf32>
    %327 = vector.extract_strided_slice %320 {offsets = [0, 96], sizes = [2, 32], strides = [1, 1]} : vector<2x128xf32> to vector<2x32xf32>
    %328 = math.tanh %327 : vector<2x32xf32>
    %329 = vector.extract_strided_slice %326 {offsets = [0, 0], sizes = [2, 32], strides = [1, 1]} : vector<2x96xf32> to vector<2x32xf32>
    %330 = vector.extract_strided_slice %326 {offsets = [0, 32], sizes = [2, 32], strides = [1, 1]} : vector<2x96xf32> to vector<2x32xf32>
    %331 = vector.extract_strided_slice %326 {offsets = [0, 64], sizes = [2, 32], strides = [1, 1]} : vector<2x96xf32> to vector<2x32xf32>
    %332 = arith.mulf %330, %314 : vector<2x32xf32>
    %333 = arith.mulf %329, %328 : vector<2x32xf32>
    %334 = arith.addf %332, %333 : vector<2x32xf32>
    %335 = math.tanh %334 : vector<2x32xf32>
    %336 = arith.mulf %331, %335 : vector<2x32xf32>
    %c14_75 = arith.constant 14 : index
    %c0_76 = arith.constant 0 : index
    %337 = vector.load %arg11[%c14_75, %c0_76] : memref<16x32xf32, #tpu.memory_space<vmem>>, vector<2x32xf32>
    tpu.vector_store %arg11[%c14_75, %c0_76], %336 {strides = array<i32>} : memref<16x32xf32, #tpu.memory_space<vmem>>, vector<2x32xf32>,
    %c0_77 = arith.constant 0 : index
    %c0_78 = arith.constant 0 : index
    %338 = vector.load %arg11[%c0_77, %c0_78] : memref<16x32xf32, #tpu.memory_space<vmem>>, vector<16x32xf32>
    %c0_79 = arith.constant 0 : index
    %c0_80 = arith.constant 0 : index
    %339 = vector.load %arg7[%c0_79, %c0_80] : memref<32x8xf32, #tpu.memory_space<vmem>>, vector<32x8xf32>
    %cst_81 = arith.constant dense<0.000000e+00> : vector<16x8xf32>
    %340 = tpu.matmul %338, %339, %cst_81 {dimension_numbers = #tpu.dot_dimension_numbers<[1], [0], [0], [1], [0, 0, 1, 1], [], []>} : vector<16x32xf32>, vector<32x8xf32>, vector<16x8xf32> -> vector<16x8xf32>
    %c0_82 = arith.constant 0 : index
    %c0_83 = arith.constant 0 : index
    %341 = vector.load %arg8[%c0_82, %c0_83] : memref<1x8xf32, #tpu.memory_space<vmem>>, vector<1x8xf32>
    %342 = vector.broadcast %341 : vector<1x8xf32> to vector<16x8xf32>
    %343 = arith.addf %340, %342 : vector<16x8xf32>
    %c0_84 = arith.constant 0 : index
    %c0_85 = arith.constant 0 : index
    %344 = vector.load %arg9[%c0_84, %c0_85] : memref<16x8xf32, #tpu.memory_space<vmem>>, vector<16x8xf32>
    tpu.vector_store %arg9[%c0_84, %c0_85], %343 {strides = array<i32>} : memref<16x8xf32, #tpu.memory_space<vmem>>, vector<16x8xf32>,
    return
  }
}

</mosaic_0001>

<llo_original>
// kernel: lstm_classifier_forward.1
$region0: #{lstm_classifier_forward.1}
  #allocation0 [shape = 'u32[]', space=smem, size = 0x4, offset = 0x4, fixed_abs, tag = 'smem constant byte address 0x4 - core index']
  #allocation1 [shape = 'u32[144,128]{1,0:T(1,128)}', space=vmem, size = 0x12000, scoped, tag = 'internal scratch']
  #allocation2 [shape = 'f32[16,32]{1,0:T(8,128)}', space=vmem, size = 0x2000, scoped, tag = 'scratch operand']
  #allocation3 [shape = 'f32[16,32]{1,0:T(8,128)}', space=vmem, size = 0x2000, scoped, tag = 'scratch operand']
  %s0 = inlined_call_operand.vmem [shape: f32[16,16], index: 0, kind: input, shape index: {}]
  %s1 = inlined_call_operand.vmem [shape: f32[16,128], index: 1, kind: input, shape index: {}]
  %s2 = inlined_call_operand.vmem [shape: f32[32,128], index: 2, kind: input, shape index: {}]
  %s3 = inlined_call_operand.vmem [shape: f32[1,128], index: 3, kind: input, shape index: {}]
  %s4 = inlined_call_operand.vmem [shape: f32[32,128], index: 4, kind: input, shape index: {}]
  %s5 = inlined_call_operand.vmem [shape: f32[32,128], index: 5, kind: input, shape index: {}]
  %s6 = inlined_call_operand.vmem [shape: f32[1,128], index: 6, kind: input, shape index: {}]
  %s7 = inlined_call_operand.vmem [shape: f32[32,8], index: 7, kind: input, shape index: {}]
  %s8 = inlined_call_operand.vmem [shape: f32[1,8], index: 8, kind: input, shape index: {}]
  %s9 = inlined_call_operand.vmem [shape: f32[16,8], index: 9, kind: output, shape index: {}]
  %s10 = sld [smem:[#allocation0]]
  $region46: #{lstm_classifier_forward.1} parent=0
    _
  %s12 = ssub.s32 1, %s10
  %s13 = scalar_select 0, %s12, %s10
  // Predicated region
  $region2: #{lstm_classifier_forward.1} parent=0 // pred_check
    _
  $region3: #{lstm_classifier_forward.1} parent=0 // pred_check_branch
    %15 = sbr.rel (0) target = $region5
  $region4: #{lstm_classifier_forward.1} parent=0 // pred_region
    _
  $region5: #{lstm_classifier_forward.1} parent=0 // pred_fallthru
    _
  // Predicated region
  $region6: #{lstm_classifier_forward.1} parent=0 // pred_check
    _
  $region7: #{lstm_classifier_forward.1} parent=0 // pred_check_branch
    %17 = sbr.rel (0) target = $region9
  $region8: #{lstm_classifier_forward.1} parent=0 // pred_region
    _
  $region9: #{lstm_classifier_forward.1} parent=0 // pred_fallthru
    _
  // Predicated region
  $region10: #{lstm_classifier_forward.1} parent=0 // pred_check
    _
  $region11: #{lstm_classifier_forward.1} parent=0 // pred_check_branch
    %19 = sbr.rel (0) target = $region13
  $region12: #{lstm_classifier_forward.1} parent=0 // pred_region
    _
  $region13: #{lstm_classifier_forward.1} parent=0 // pred_fallthru
    _
  // Predicated region
  $region14: #{lstm_classifier_forward.1} parent=0 // pred_check
    _
  $region15: #{lstm_classifier_forward.1} parent=0 // pred_check_branch
    %21 = sbr.rel (0) target = $region17
  $region16: #{lstm_classifier_forward.1} parent=0 // pred_region
    _
  $region17: #{lstm_classifier_forward.1} parent=0 // pred_fallthru
    _
  // Predicated region
  $region18: #{lstm_classifier_forward.1} parent=0 // pred_check
    _
  $region19: #{lstm_classifier_forward.1} parent=0 // pred_check_branch
    %23 = sbr.rel (0) target = $region21
  $region20: #{lstm_classifier_forward.1} parent=0 // pred_region
    _
  $region21: #{lstm_classifier_forward.1} parent=0 // pred_fallthru
    _
  // Predicated region
  $region22: #{lstm_classifier_forward.1} parent=0 // pred_check
    _
  $region23: #{lstm_classifier_forward.1} parent=0 // pred_check_branch
    %25 = sbr.rel (0) target = $region25
  $region24: #{lstm_classifier_forward.1} parent=0 // pred_region
    _
  $region25: #{lstm_classifier_forward.1} parent=0 // pred_fallthru
    _
  // Predicated region
  $region26: #{lstm_classifier_forward.1} parent=0 // pred_check
    _
  $region27: #{lstm_classifier_forward.1} parent=0 // pred_check_branch
    %27 = sbr.rel (0) target = $region29
  $region28: #{lstm_classifier_forward.1} parent=0 // pred_region
    _
  $region29: #{lstm_classifier_forward.1} parent=0 // pred_fallthru
    _
  // Predicated region
  $region30: #{lstm_classifier_forward.1} parent=0 // pred_check
    _
  $region31: #{lstm_classifier_forward.1} parent=0 // pred_check_branch
    %29 = sbr.rel (0) target = $region33
  $region32: #{lstm_classifier_forward.1} parent=0 // pred_region
    _
  $region33: #{lstm_classifier_forward.1} parent=0 // pred_fallthru
    _
  // Predicated region
  $region34: #{lstm_classifier_forward.1} parent=0 // pred_check
    _
  $region35: #{lstm_classifier_forward.1} parent=0 // pred_check_branch
    %31 = sbr.rel (0) target = $region37
  $region36: #{lstm_classifier_forward.1} parent=0 // pred_region
    _
  $region37: #{lstm_classifier_forward.1} parent=0 // pred_fallthru
    _
  %v32 = vld [vmem:[%s0] sm:$0xff]
  %v33 = vld [vmem:[%s0 + $0x8] sm:$0xff]
  %v34 = vld [vmem:[%s1] sm:$0xff]
  %v35 = vld [vmem:[%s1 + $0x8] sm:$0xff]
  %v36 = vld [vmem:[%s3] sm:$0x1]
  %v38 = vlaneseq
  %v39 = vshrl.u32 %v38, 7
  %v40 = vsub.s32 0, %v39
  %v41 = vrot.slane %v36, %v40
  %vm43 = vcmask 130048
  %v45 = vsel %vm43, %v32, 0
  %v48 = vsel %vm43, %v33, 0
  %50 = vmatprep.subr.mxu0 0.0
  %51 = vmatpush1.msra.mxu0 0.0
  %52 = vmatprep.subr.mxu0 0.0
  %53 = vmatpush1.msra.mxu0 0.0
  %54 = vmatprep.subr.mxu0 0.0
  %55 = vmatpush1.msra.mxu0 0.0
  %56 = vmatprep.subr.mxu0 0.0
  %57 = vmatpush1.msra.mxu0 0.0
  %58 = vmatprep.subr.mxu0 0.0
  %59 = vmatpush1.msra.mxu0 0.0
  %60 = vmatprep.subr.mxu0 0.0
  %61 = vmatpush1.msra.mxu0 0.0
  %62 = vmatprep.subr.mxu0 0.0
  %63 = vmatpush1.msra.mxu0 0.0
  %64 = vmatprep.subr.mxu0 0.0
  %65 = vmatpush1.msra.mxu0 0.0
  %66 = vmatprep.subr.mxu0 0.0
  %67 = vmatpush1.msra.mxu0 0.0
  %68 = vmatprep.subr.mxu0 0.0
  %69 = vmatpush1.msra.mxu0 0.0
  %70 = vmatprep.subr.mxu0 0.0
  %71 = vmatpush1.msra.mxu0 0.0
  %72 = vmatprep.subr.mxu0 0.0
  %73 = vmatpush1.msra.mxu0 0.0
  %74 = vmatprep.subr.mxu0 0.0
  %75 = vmatpush1.msra.mxu0 0.0
  %76 = vmatprep.subr.mxu0 0.0
  %77 = vmatpush1.msra.mxu0 0.0
  %78 = vmatprep.subr.mxu0 0.0
  %79 = vmatpush1.msra.mxu0 %v35
  %80 = vmatprep.subr.mxu0 0.0
  %81 = vmatpush1.msra.mxu0 %v34
  %82 = vmatprep.subr.mxu0 0.0
  %83 = vmatpush2.msra.mxu0 0.0
  %84 = vmatprep.subr.mxu0 0.0
  %85 = vmatpush2.msra.mxu0 0.0
  %86 = vmatprep.subr.mxu0 0.0
  %87 = vmatpush2.msra.mxu0 0.0
  %88 = vmatprep.subr.mxu0 0.0
  %89 = vmatpush2.msra.mxu0 0.0
  %90 = vmatprep.subr.mxu0 0.0
  %91 = vmatpush2.msra.mxu0 0.0
  %92 = vmatprep.subr.mxu0 0.0
  %93 = vmatpush2.msra.mxu0 0.0
  %94 = vmatprep.subr.mxu0 0.0
  %95 = vmatpush2.msra.mxu0 0.0
  %96 = vmatprep.subr.mxu0 0.0
  %97 = vmatpush2.msra.mxu0 0.0
  %98 = vmatprep.subr.mxu0 0.0
  %99 = vmatpush2.msra.mxu0 0.0
  %100 = vmatprep.subr.mxu0 0.0
  %101 = vmatpush2.msra.mxu0 0.0
  %102 = vmatprep.subr.mxu0 0.0
  %103 = vmatpush2.msra.mxu0 0.0
  %104 = vmatprep.subr.mxu0 0.0
  %105 = vmatpush2.msra.mxu0 0.0
  %106 = vmatprep.subr.mxu0 0.0
  %107 = vmatpush2.msra.mxu0 0.0
  %108 = vmatprep.subr.mxu0 0.0
  %109 = vmatpush2.msra.mxu0 0.0
  %110 = vmatprep.subr.mxu0 0.0
  %111 = vmatpush2.msra.mxu0 0.0
  %112 = vmatprep.subr.mxu0 0.0
  %113 = vmatpush2.msra.mxu0 0.0
  %114 = vmatprep.mubr.f32.mxu0 0.0
  %115 = vmatmul.mubr.f32.gmra.mxu0 %v45
  %v116 = vpop.f32.mrf.mxu0
  %v117 = vadd.f32 %v41, %v116
  %v118 = vpop.f32.mrf.mxu0
  %119 = vmatprep.mubr.f32.mxu0 0.0
  %120 = vmatmul.mubr.f32.gmra.mxu0 %v48
  %v121 = vpop.f32.mrf.mxu0
  %v122 = vadd.f32 %v41, %v121
  %v123 = vpop.f32.mrf.mxu0
  %124 = vdwg.mxu0
  %v125 = vld [vmem:[%s2] sm:$0xff]
  %v126 = vld [vmem:[%s2 + $0x8] sm:$0xff]
  %v127 = vld [vmem:[%s2 + $0x10] sm:$0xff]
  %v128 = vld [vmem:[%s2 + $0x18] sm:$0xff]
  %vm129 = vcmask 261120
  %v131 = vsel %vm129, 0.0, 0
  %133 = vmatprep.subr.mxu0 0.0
  %134 = vmatpush1.msra.mxu0 0.0
  %135 = vmatprep.subr.mxu0 0.0
  %136 = vmatpush1.msra.mxu0 0.0
  %137 = vmatprep.subr.mxu0 0.0
  %138 = vmatpush1.msra.mxu0 0.0
  %139 = vmatprep.subr.mxu0 0.0
  %140 = vmatpush1.msra.mxu0 0.0
  %141 = vmatprep.subr.mxu0 0.0
  %142 = vmatpush1.msra.mxu0 0.0
  %143 = vmatprep.subr.mxu0 0.0
  %144 = vmatpush1.msra.mxu0 0.0
  %145 = vmatprep.subr.mxu0 0.0
  %146 = vmatpush1.msra.mxu0 0.0
  %147 = vmatprep.subr.mxu0 0.0
  %148 = vmatpush1.msra.mxu0 0.0
  %149 = vmatprep.subr.mxu0 0.0
  %150 = vmatpush1.msra.mxu0 0.0
  %151 = vmatprep.subr.mxu0 0.0
  %152 = vmatpush1.msra.mxu0 0.0
  %153 = vmatprep.subr.mxu0 0.0
  %154 = vmatpush1.msra.mxu0 0.0
  %155 = vmatprep.subr.mxu0 0.0
  %156 = vmatpush1.msra.mxu0 0.0
  %157 = vmatprep.subr.mxu0 0.0
  %158 = vmatpush1.msra.mxu0 %v128
  %159 = vmatprep.subr.mxu0 0.0
  %160 = vmatpush1.msra.mxu0 %v127
  %161 = vmatprep.subr.mxu0 0.0
  %162 = vmatpush1.msra.mxu0 %v126
  %163 = vmatprep.subr.mxu0 0.0
  %164 = vmatpush1.msra.mxu0 %v125
  %165 = vmatprep.subr.mxu0 0.0
  %166 = vmatpush2.msra.mxu0 0.0
  %167 = vmatprep.subr.mxu0 0.0
  %168 = vmatpush2.msra.mxu0 0.0
  %169 = vmatprep.subr.mxu0 0.0
  %170 = vmatpush2.msra.mxu0 0.0
  %171 = vmatprep.subr.mxu0 0.0
  %172 = vmatpush2.msra.mxu0 0.0
  %173 = vmatprep.subr.mxu0 0.0
  %174 = vmatpush2.msra.mxu0 0.0
  %175 = vmatprep.subr.mxu0 0.0
  %176 = vmatpush2.msra.mxu0 0.0
  %177 = vmatprep.subr.mxu0 0.0
  %178 = vmatpush2.msra.mxu0 0.0
  %179 = vmatprep.subr.mxu0 0.0
  %180 = vmatpush2.msra.mxu0 0.0
  %181 = vmatprep.subr.mxu0 0.0
  %182 = vmatpush2.msra.mxu0 0.0
  %183 = vmatprep.subr.mxu0 0.0
  %184 = vmatpush2.msra.mxu0 0.0
  %185 = vmatprep.subr.mxu0 0.0
  %186 = vmatpush2.msra.mxu0 0.0
  %187 = vmatprep.subr.mxu0 0.0
  %188 = vmatpush2.msra.mxu0 0.0
  %189 = vmatprep.subr.mxu0 0.0
  %190 = vmatpush2.msra.mxu0 0.0
  %191 = vmatprep.subr.mxu0 0.0
  %192 = vmatpush2.msra.mxu0 0.0
  %193 = vmatprep.subr.mxu0 0.0
  %194 = vmatpush2.msra.mxu0 0.0
  %195 = vmatprep.subr.mxu0 0.0
  %196 = vmatpush2.msra.mxu0 0.0
  %197 = vmatprep.mubr.f32.mxu0 0.0
  %198 = vmatmul.mubr.f32.gmra.mxu0 %v131
  %v199 = vpop.f32.mrf.mxu0
  %v200 = vadd.f32 0.0, %v199
  %v201 = vpop.f32.mrf.mxu0
  %202 = vdwg.mxu0
  %v203 = vadd.f32 %v117, %v200
  %v204 = vxor.u32 %v203, 2147483648
  %v205 = vmul.f32 %v204, 1.442695
  %v206 = vpow.pop %v205
  %v207 = vadd.f32 %v206, 1.0
  %v208 = vrcp.pop %v207
  %v209 = vmul.f32 1.0, %v208
  %v210 = vtanh.pop %v203
  %v211 = vmul.f32 %v209, 0.0
  %213 = vrot.lane.b32.xlu0 %v210, 32
  %v214 = vpop.permute.xlu0 %213
  %v216 = vmul.f32 %v209, %v214
  %218 = vrot.lane.b32.xlu0 %v216, 32
  %v219 = vpop.permute.xlu0 %218
  %v221 = vadd.f32 %v211, %v219
  %v222 = vtanh.pop %v221
  %224 = vrot.lane.b32.xlu0 %v222, 32
  %v225 = vpop.permute.xlu0 %224
  %v227 = vmul.f32 %v209, %v225
  %229 = vrot.lane.b32.xlu0 %v227, 64
  %v230 = vpop.permute.xlu0 %229
  %vm232 = vcmask 254976
  %233 = vst.msk [vmem:[#allocation2] sm:$0x3] %vm232, %v230
  %v234 = vsel %vm129, %v230, 0
  %236 = vmatprep.subr.mxu0 0.0
  %237 = vmatpush1.msra.mxu0 0.0
  %238 = vmatprep.subr.mxu0 0.0
  %239 = vmatpush1.msra.mxu0 0.0
  %240 = vmatprep.subr.mxu0 0.0
  %241 = vmatpush1.msra.mxu0 0.0
  %242 = vmatprep.subr.mxu0 0.0
  %243 = vmatpush1.msra.mxu0 0.0
  %244 = vmatprep.subr.mxu0 0.0
  %245 = vmatpush1.msra.mxu0 0.0
  %246 = vmatprep.subr.mxu0 0.0
  %247 = vmatpush1.msra.mxu0 0.0
  %248 = vmatprep.subr.mxu0 0.0
  %249 = vmatpush1.msra.mxu0 0.0
  %250 = vmatprep.subr.mxu0 0.0
  %251 = vmatpush1.msra.mxu0 0.0
  %252 = vmatprep.subr.mxu0 0.0
  %253 = vmatpush1.msra.mxu0 0.0
  %254 = vmatprep.subr.mxu0 0.0
  %255 = vmatpush1.msra.mxu0 0.0
  %256 = vmatprep.subr.mxu0 0.0
  %257 = vmatpush1.msra.mxu0 0.0
  %258 = vmatprep.subr.mxu0 0.0
  %259 = vmatpush1.msra.mxu0 0.0
  %260 = vmatprep.subr.mxu0 0.0
  %261 = vmatpush1.msra.mxu0 %v128
  %262 = vmatprep.subr.mxu0 0.0
  %263 = vmatpush1.msra.mxu0 %v127
  %264 = vmatprep.subr.mxu0 0.0
  %265 = vmatpush1.msra.mxu0 %v126
  %266 = vmatprep.subr.mxu0 0.0
  %267 = vmatpush1.msra.mxu0 %v125
  %268 = vmatprep.subr.mxu0 0.0
  %269 = vmatpush2.msra.mxu0 0.0
  %270 = vmatprep.subr.mxu0 0.0
  %271 = vmatpush2.msra.mxu0 0.0
  %272 = vmatprep.subr.mxu0 0.0
  %273 = vmatpush2.msra.mxu0 0.0
  %274 = vmatprep.subr.mxu0 0.0
  %275 = vmatpush2.msra.mxu0 0.0
  %276 = vmatprep.subr.mxu0 0.0
  %277 = vmatpush2.msra.mxu0 0.0
  %278 = vmatprep.subr.mxu0 0.0
  %279 = vmatpush2.msra.mxu0 0.0
  %280 = vmatprep.subr.mxu0 0.0
  %281 = vmatpush2.msra.mxu0 0.0
  %282 = vmatprep.subr.mxu0 0.0
  %283 = vmatpush2.msra.mxu0 0.0
  %284 = vmatprep.subr.mxu0 0.0
  %285 = vmatpush2.msra.mxu0 0.0
  %286 = vmatprep.subr.mxu0 0.0
  %287 = vmatpush2.msra.mxu0 0.0
  %288 = vmatprep.subr.mxu0 0.0
  %289 = vmatpush2.msra.mxu0 0.0
  %290 = vmatprep.subr.mxu0 0.0
  %291 = vmatpush2.msra.mxu0 0.0
  %292 = vmatprep.subr.mxu0 0.0
  %293 = vmatpush2.msra.mxu0 0.0
  %294 = vmatprep.subr.mxu0 0.0
  %295 = vmatpush2.msra.mxu0 0.0
  %296 = vmatprep.subr.mxu0 0.0
  %297 = vmatpush2.msra.mxu0 0.0
  %298 = vmatprep.subr.mxu0 0.0
  %299 = vmatpush2.msra.mxu0 0.0
  %300 = vmatprep.mubr.f32.mxu0 0.0
  %301 = vmatmul.mubr.f32.gmra.mxu0 %v234
  %v302 = vpop.f32.mrf.mxu0
  %v303 = vadd.f32 0.0, %v302
  %v304 = vpop.f32.mrf.mxu0
  %305 = vdwg.mxu0
  %v307 = vrot.slane %v303, 6
  %v309 = vadd.f32 %v117, %v307
  %v310 = vxor.u32 %v309, 2147483648
  %v311 = vmul.f32 %v310, 1.442695
  %v312 = vpow.pop %v311
  %v313 = vadd.f32 %v312, 1.0
  %v314 = vrcp.pop %v313
  %v315 = vmul.f32 1.0, %v314
  %v316 = vtanh.pop %v309
  %v318 = vrot.slane %v221, 6
  %v320 = vmul.f32 %v315, %v318
  %322 = vrot.lane.b32.xlu0 %v316, 32
  %v323 = vpop.permute.xlu0 %322
  %v325 = vmul.f32 %v315, %v323
  %327 = vrot.lane.b32.xlu0 %v325, 32
  %v328 = vpop.permute.xlu0 %327
  %v330 = vadd.f32 %v320, %v328
  %v331 = vtanh.pop %v330
  %333 = vrot.lane.b32.xlu0 %v331, 32
  %v334 = vpop.permute.xlu0 %333
  %v336 = vmul.f32 %v315, %v334
  %338 = vrot.lane.b32.xlu0 %v336, 64
  %v339 = vpop.permute.xlu0 %338
  %vm341 = vcmask 257026
  %342 = vst.msk [vmem:[#allocation2] sm:$0xc] %vm341, %v339
  %v343 = vrot.slane %v336, 2
  %344 = vrot.lane.b32.xlu0 %v343, 64
  %v345 = vpop.permute.xlu0 %344
  %v346 = vsel %vm129, %v345, 0
  %348 = vmatprep.subr.mxu0 0.0
  %349 = vmatpush1.msra.mxu0 0.0
  %350 = vmatprep.subr.mxu0 0.0
  %351 = vmatpush1.msra.mxu0 0.0
  %352 = vmatprep.subr.mxu0 0.0
  %353 = vmatpush1.msra.mxu0 0.0
  %354 = vmatprep.subr.mxu0 0.0
  %355 = vmatpush1.msra.mxu0 0.0
  %356 = vmatprep.subr.mxu0 0.0
  %357 = vmatpush1.msra.mxu0 0.0
  %358 = vmatprep.subr.mxu0 0.0
  %359 = vmatpush1.msra.mxu0 0.0
  %360 = vmatprep.subr.mxu0 0.0
  %361 = vmatpush1.msra.mxu0 0.0
  %362 = vmatprep.subr.mxu0 0.0
  %363 = vmatpush1.msra.mxu0 0.0
  %364 = vmatprep.subr.mxu0 0.0
  %365 = vmatpush1.msra.mxu0 0.0
  %366 = vmatprep.subr.mxu0 0.0
  %367 = vmatpush1.msra.mxu0 0.0
  %368 = vmatprep.subr.mxu0 0.0
  %369 = vmatpush1.msra.mxu0 0.0
  %370 = vmatprep.subr.mxu0 0.0
  %371 = vmatpush1.msra.mxu0 0.0
  %372 = vmatprep.subr.mxu0 0.0
  %373 = vmatpush1.msra.mxu0 %v128
  %374 = vmatprep.subr.mxu0 0.0
  %375 = vmatpush1.msra.mxu0 %v127
  %376 = vmatprep.subr.mxu0 0.0
  %377 = vmatpush1.msra.mxu0 %v126
  %378 = vmatprep.subr.mxu0 0.0
  %379 = vmatpush1.msra.mxu0 %v125
  %380 = vmatprep.subr.mxu0 0.0
  %381 = vmatpush2.msra.mxu0 0.0
  %382 = vmatprep.subr.mxu0 0.0
  %383 = vmatpush2.msra.mxu0 0.0
  %384 = vmatprep.subr.mxu0 0.0
  %385 = vmatpush2.msra.mxu0 0.0
  %386 = vmatprep.subr.mxu0 0.0
  %387 = vmatpush2.msra.mxu0 0.0
  %388 = vmatprep.subr.mxu0 0.0
  %389 = vmatpush2.msra.mxu0 0.0
  %390 = vmatprep.subr.mxu0 0.0
  %391 = vmatpush2.msra.mxu0 0.0
  %392 = vmatprep.subr.mxu0 0.0
  %393 = vmatpush2.msra.mxu0 0.0
  %394 = vmatprep.subr.mxu0 0.0
  %395 = vmatpush2.msra.mxu0 0.0
  %396 = vmatprep.subr.mxu0 0.0
  %397 = vmatpush2.msra.mxu0 0.0
  %398 = vmatprep.subr.mxu0 0.0
  %399 = vmatpush2.msra.mxu0 0.0
  %400 = vmatprep.subr.mxu0 0.0
  %401 = vmatpush2.msra.mxu0 0.0
  %402 = vmatprep.subr.mxu0 0.0
  %403 = vmatpush2.msra.mxu0 0.0
  %404 = vmatprep.subr.mxu0 0.0
  %405 = vmatpush2.msra.mxu0 0.0
  %406 = vmatprep.subr.mxu0 0.0
  %407 = vmatpush2.msra.mxu0 0.0
  %408 = vmatprep.subr.mxu0 0.0
  %409 = vmatpush2.msra.mxu0 0.0
  %410 = vmatprep.subr.mxu0 0.0
  %411 = vmatpush2.msra.mxu0 0.0
  %412 = vmatprep.mubr.f32.mxu0 0.0
  %413 = vmatmul.mubr.f32.gmra.mxu0 %v346
  %v414 = vpop.f32.mrf.mxu0
  %v415 = vadd.f32 0.0, %v414
  %v416 = vpop.f32.mrf.mxu0
  %417 = vdwg.mxu0
  %v419 = vrot.slane %v415, 4
  %v421 = vadd.f32 %v117, %v419
  %v422 = vxor.u32 %v421, 2147483648
  %v423 = vmul.f32 %v422, 1.442695
  %v424 = vpow.pop %v423
  %v425 = vadd.f32 %v424, 1.0
  %v426 = vrcp.pop %v425
  %v427 = vmul.f32 1.0, %v426
  %v428 = vtanh.pop %v421
  %v430 = vrot.slane %v330, 6
  %v432 = vmul.f32 %v427, %v430
  %434 = vrot.lane.b32.xlu0 %v428, 32
  %v435 = vpop.permute.xlu0 %434
  %v437 = vmul.f32 %v427, %v435
  %439 = vrot.lane.b32.xlu0 %v437, 32
  %v440 = vpop.permute.xlu0 %439
  %v442 = vadd.f32 %v432, %v440
  %v443 = vtanh.pop %v442
  %445 = vrot.lane.b32.xlu0 %v443, 32
  %v446 = vpop.permute.xlu0 %445
  %v448 = vmul.f32 %v427, %v446
  %450 = vrot.lane.b32.xlu0 %v448, 64
  %v451 = vpop.permute.xlu0 %450
  %vm453 = vcmask 259076
  %454 = vst.msk [vmem:[#allocation2] sm:$0x30] %vm453, %v451
  %v455 = vrot.slane %v448, 4
  %456 = vrot.lane.b32.xlu0 %v455, 64
  %v457 = vpop.permute.xlu0 %456
  %v458 = vsel %vm129, %v457, 0
  %460 = vmatprep.subr.mxu0 0.0
  %461 = vmatpush1.msra.mxu0 0.0
  %462 = vmatprep.subr.mxu0 0.0
  %463 = vmatpush1.msra.mxu0 0.0
  %464 = vmatprep.subr.mxu0 0.0
  %465 = vmatpush1.msra.mxu0 0.0
  %466 = vmatprep.subr.mxu0 0.0
  %467 = vmatpush1.msra.mxu0 0.0
  %468 = vmatprep.subr.mxu0 0.0
  %469 = vmatpush1.msra.mxu0 0.0
  %470 = vmatprep.subr.mxu0 0.0
  %471 = vmatpush1.msra.mxu0 0.0
  %472 = vmatprep.subr.mxu0 0.0
  %473 = vmatpush1.msra.mxu0 0.0
  %474 = vmatprep.subr.mxu0 0.0
  %475 = vmatpush1.msra.mxu0 0.0
  %476 = vmatprep.subr.mxu0 0.0
  %477 = vmatpush1.msra.mxu0 0.0
  %478 = vmatprep.subr.mxu0 0.0
  %479 = vmatpush1.msra.mxu0 0.0
  %480 = vmatprep.subr.mxu0 0.0
  %481 = vmatpush1.msra.mxu0 0.0
  %482 = vmatprep.subr.mxu0 0.0
  %483 = vmatpush1.msra.mxu0 0.0
  %484 = vmatprep.subr.mxu0 0.0
  %485 = vmatpush1.msra.mxu0 %v128
  %486 = vmatprep.subr.mxu0 0.0
  %487 = vmatpush1.msra.mxu0 %v127
  %488 = vmatprep.subr.mxu0 0.0
  %489 = vmatpush1.msra.mxu0 %v126
  %490 = vmatprep.subr.mxu0 0.0
  %491 = vmatpush1.msra.mxu0 %v125
  %492 = vmatprep.subr.mxu0 0.0
  %493 = vmatpush2.msra.mxu0 0.0
  %494 = vmatprep.subr.mxu0 0.0
  %495 = vmatpush2.msra.mxu0 0.0
  %496 = vmatprep.subr.mxu0 0.0
  %497 = vmatpush2.msra.mxu0 0.0
  %498 = vmatprep.subr.mxu0 0.0
  %499 = vmatpush2.msra.mxu0 0.0
  %500 = vmatprep.subr.mxu0 0.0
  %501 = vmatpush2.msra.mxu0 0.0
  %502 = vmatprep.subr.mxu0 0.0
  %503 = vmatpush2.msra.mxu0 0.0
  %504 = vmatprep.subr.mxu0 0.0
  %505 = vmatpush2.msra.mxu0 0.0
  %506 = vmatprep.subr.mxu0 0.0
  %507 = vmatpush2.msra.mxu0 0.0
  %508 = vmatprep.subr.mxu0 0.0
  %509 = vmatpush2.msra.mxu0 0.0
  %510 = vmatprep.subr.mxu0 0.0
  %511 = vmatpush2.msra.mxu0 0.0
  %512 = vmatprep.subr.mxu0 0.0
  %513 = vmatpush2.msra.mxu0 0.0
  %514 = vmatprep.subr.mxu0 0.0
  %515 = vmatpush2.msra.mxu0 0.0
  %516 = vmatprep.subr.mxu0 0.0
  %517 = vmatpush2.msra.mxu0 0.0
  %518 = vmatprep.subr.mxu0 0.0
  %519 = vmatpush2.msra.mxu0 0.0
  %520 = vmatprep.subr.mxu0 0.0
  %521 = vmatpush2.msra.mxu0 0.0
  %522 = vmatprep.subr.mxu0 0.0
  %523 = vmatpush2.msra.mxu0 0.0
  %524 = vmatprep.mubr.f32.mxu0 0.0
  %525 = vmatmul.mubr.f32.gmra.mxu0 %v458
  %v526 = vpop.f32.mrf.mxu0
  %v527 = vadd.f32 0.0, %v526
  %v528 = vpop.f32.mrf.mxu0
  %529 = vdwg.mxu0
  %v531 = vrot.slane %v527, 2
  %v533 = vadd.f32 %v117, %v531
  %v534 = vxor.u32 %v533, 2147483648
  %v535 = vmul.f32 %v534, 1.442695
  %v536 = vpow.pop %v535
  %v537 = vadd.f32 %v536, 1.0
  %v538 = vrcp.pop %v537
  %v539 = vmul.f32 1.0, %v538
  %v540 = vtanh.pop %v533
  %v542 = vrot.slane %v442, 6
  %v544 = vmul.f32 %v539, %v542
  %546 = vrot.lane.b32.xlu0 %v540, 32
  %v547 = vpop.permute.xlu0 %546
  %v549 = vmul.f32 %v539, %v547
  %551 = vrot.lane.b32.xlu0 %v549, 32
  %v552 = vpop.permute.xlu0 %551
  %v554 = vadd.f32 %v544, %v552
  %v555 = vtanh.pop %v554
  %557 = vrot.lane.b32.xlu0 %v555, 32
  %v558 = vpop.permute.xlu0 %557
  %v560 = vmul.f32 %v539, %v558
  %562 = vrot.lane.b32.xlu0 %v560, 64
  %v563 = vpop.permute.xlu0 %562
  %vm565 = vcmask 261126
  %566 = vst.msk [vmem:[#allocation2] sm:$0xc0] %vm565, %v563
  %v567 = vrot.slane %v560, 6
  %568 = vrot.lane.b32.xlu0 %v567, 64
  %v569 = vpop.permute.xlu0 %568
  %v570 = vsel %vm129, %v569, 0
  %572 = vmatprep.subr.mxu0 0.0
  %573 = vmatpush1.msra.mxu0 0.0
  %574 = vmatprep.subr.mxu0 0.0
  %575 = vmatpush1.msra.mxu0 0.0
  %576 = vmatprep.subr.mxu0 0.0
  %577 = vmatpush1.msra.mxu0 0.0
  %578 = vmatprep.subr.mxu0 0.0
  %579 = vmatpush1.msra.mxu0 0.0
  %580 = vmatprep.subr.mxu0 0.0
  %581 = vmatpush1.msra.mxu0 0.0
  %582 = vmatprep.subr.mxu0 0.0
  %583 = vmatpush1.msra.mxu0 0.0
  %584 = vmatprep.subr.mxu0 0.0
  %585 = vmatpush1.msra.mxu0 0.0
  %586 = vmatprep.subr.mxu0 0.0
  %587 = vmatpush1.msra.mxu0 0.0
  %588 = vmatprep.subr.mxu0 0.0
  %589 = vmatpush1.msra.mxu0 0.0
  %590 = vmatprep.subr.mxu0 0.0
  %591 = vmatpush1.msra.mxu0 0.0
  %592 = vmatprep.subr.mxu0 0.0
  %593 = vmatpush1.msra.mxu0 0.0
  %594 = vmatprep.subr.mxu0 0.0
  %595 = vmatpush1.msra.mxu0 0.0
  %596 = vmatprep.subr.mxu0 0.0
  %597 = vmatpush1.msra.mxu0 %v128
  %598 = vmatprep.subr.mxu0 0.0
  %599 = vmatpush1.msra.mxu0 %v127
  %600 = vmatprep.subr.mxu0 0.0
  %601 = vmatpush1.msra.mxu0 %v126
  %602 = vmatprep.subr.mxu0 0.0
  %603 = vmatpush1.msra.mxu0 %v125
  %604 = vmatprep.subr.mxu0 0.0
  %605 = vmatpush2.msra.mxu0 0.0
  %606 = vmatprep.subr.mxu0 0.0
  %607 = vmatpush2.msra.mxu0 0.0
  %608 = vmatprep.subr.mxu0 0.0
  %609 = vmatpush2.msra.mxu0 0.0
  %610 = vmatprep.subr.mxu0 0.0
  %611 = vmatpush2.msra.mxu0 0.0
  %612 = vmatprep.subr.mxu0 0.0
  %613 = vmatpush2.msra.mxu0 0.0
  %614 = vmatprep.subr.mxu0 0.0
  %615 = vmatpush2.msra.mxu0 0.0
  %616 = vmatprep.subr.mxu0 0.0
  %617 = vmatpush2.msra.mxu0 0.0
  %618 = vmatprep.subr.mxu0 0.0
  %619 = vmatpush2.msra.mxu0 0.0
  %620 = vmatprep.subr.mxu0 0.0
  %621 = vmatpush2.msra.mxu0 0.0
  %622 = vmatprep.subr.mxu0 0.0
  %623 = vmatpush2.msra.mxu0 0.0
  %624 = vmatprep.subr.mxu0 0.0
  %625 = vmatpush2.msra.mxu0 0.0
  %626 = vmatprep.subr.mxu0 0.0
  %627 = vmatpush2.msra.mxu0 0.0
  %628 = vmatprep.subr.mxu0 0.0
  %629 = vmatpush2.msra.mxu0 0.0
  %630 = vmatprep.subr.mxu0 0.0
  %631 = vmatpush2.msra.mxu0 0.0
  %632 = vmatprep.subr.mxu0 0.0
  %633 = vmatpush2.msra.mxu0 0.0
  %634 = vmatprep.subr.mxu0 0.0
  %635 = vmatpush2.msra.mxu0 0.0
  %636 = vmatprep.mubr.f32.mxu0 0.0
  %637 = vmatmul.mubr.f32.gmra.mxu0 %v570
  %v638 = vpop.f32.mrf.mxu0
  %v639 = vadd.f32 0.0, %v638
  %v640 = vpop.f32.mrf.mxu0
  %641 = vdwg.mxu0
  %v642 = vadd.f32 %v122, %v639
  %v643 = vxor.u32 %v642, 2147483648
  %v644 = vmul.f32 %v643, 1.442695
  %v645 = vpow.pop %v644
  %v646 = vadd.f32 %v645, 1.0
  %v647 = vrcp.pop %v646
  %v648 = vmul.f32 1.0, %v647
  %v649 = vtanh.pop %v642
  %v651 = vrot.slane %v554, 6
  %v653 = vmul.f32 %v648, %v651
  %655 = vrot.lane.b32.xlu0 %v649, 32
  %v656 = vpop.permute.xlu0 %655
  %v658 = vmul.f32 %v648, %v656
  %660 = vrot.lane.b32.xlu0 %v658, 32
  %v661 = vpop.permute.xlu0 %660
  %v663 = vadd.f32 %v653, %v661
  %v664 = vtanh.pop %v663
  %666 = vrot.lane.b32.xlu0 %v664, 32
  %v667 = vpop.permute.xlu0 %666
  %v669 = vmul.f32 %v648, %v667
  %671 = vrot.lane.b32.xlu0 %v669, 64
  %v672 = vpop.permute.xlu0 %671
  %674 = vst.msk [vmem:[#allocation2 + $0x8] sm:$0x3] %vm232, %v672
  %v675 = vsel %vm129, %v672, 0
  %677 = vmatprep.subr.mxu0 0.0
  %678 = vmatpush1.msra.mxu0 0.0
  %679 = vmatprep.subr.mxu0 0.0
  %680 = vmatpush1.msra.mxu0 0.0
  %681 = vmatprep.subr.mxu0 0.0
  %682 = vmatpush1.msra.mxu0 0.0
  %683 = vmatprep.subr.mxu0 0.0
  %684 = vmatpush1.msra.mxu0 0.0
  %685 = vmatprep.subr.mxu0 0.0
  %686 = vmatpush1.msra.mxu0 0.0
  %687 = vmatprep.subr.mxu0 0.0
  %688 = vmatpush1.msra.mxu0 0.0
  %689 = vmatprep.subr.mxu0 0.0
  %690 = vmatpush1.msra.mxu0 0.0
  %691 = vmatprep.subr.mxu0 0.0
  %692 = vmatpush1.msra.mxu0 0.0
  %693 = vmatprep.subr.mxu0 0.0
  %694 = vmatpush1.msra.mxu0 0.0
  %695 = vmatprep.subr.mxu0 0.0
  %696 = vmatpush1.msra.mxu0 0.0
  %697 = vmatprep.subr.mxu0 0.0
  %698 = vmatpush1.msra.mxu0 0.0
  %699 = vmatprep.subr.mxu0 0.0
  %700 = vmatpush1.msra.mxu0 0.0
  %701 = vmatprep.subr.mxu0 0.0
  %702 = vmatpush1.msra.mxu0 %v128
  %703 = vmatprep.subr.mxu0 0.0
  %704 = vmatpush1.msra.mxu0 %v127
  %705 = vmatprep.subr.mxu0 0.0
  %706 = vmatpush1.msra.mxu0 %v126
  %707 = vmatprep.subr.mxu0 0.0
  %708 = vmatpush1.msra.mxu0 %v125
  %709 = vmatprep.subr.mxu0 0.0
  %710 = vmatpush2.msra.mxu0 0.0
  %711 = vmatprep.subr.mxu0 0.0
  %712 = vmatpush2.msra.mxu0 0.0
  %713 = vmatprep.subr.mxu0 0.0
  %714 = vmatpush2.msra.mxu0 0.0
  %715 = vmatprep.subr.mxu0 0.0
  %716 = vmatpush2.msra.mxu0 0.0
  %717 = vmatprep.subr.mxu0 0.0
  %718 = vmatpush2.msra.mxu0 0.0
  %719 = vmatprep.subr.mxu0 0.0
  %720 = vmatpush2.msra.mxu0 0.0
  %721 = vmatprep.subr.mxu0 0.0
  %722 = vmatpush2.msra.mxu0 0.0
  %723 = vmatprep.subr.mxu0 0.0
  %724 = vmatpush2.msra.mxu0 0.0
  %725 = vmatprep.subr.mxu0 0.0
  %726 = vmatpush2.msra.mxu0 0.0
  %727 = vmatprep.subr.mxu0 0.0
  %728 = vmatpush2.msra.mxu0 0.0
  %729 = vmatprep.subr.mxu0 0.0
  %730 = vmatpush2.msra.mxu0 0.0
  %731 = vmatprep.subr.mxu0 0.0
  %732 = vmatpush2.msra.mxu0 0.0
  %733 = vmatprep.subr.mxu0 0.0
  %734 = vmatpush2.msra.mxu0 0.0
  %735 = vmatprep.subr.mxu0 0.0
  %736 = vmatpush2.msra.mxu0 0.0
  %737 = vmatprep.subr.mxu0 0.0
  %738 = vmatpush2.msra.mxu0 0.0
  %739 = vmatprep.subr.mxu0 0.0
  %740 = vmatpush2.msra.mxu0 0.0
  %741 = vmatprep.mubr.f32.mxu0 0.0
  %742 = vmatmul.mubr.f32.gmra.mxu0 %v675
  %v743 = vpop.f32.mrf.mxu0
  %v744 = vadd.f32 0.0, %v743
  %v745 = vpop.f32.mrf.mxu0
  %746 = vdwg.mxu0
  %v748 = vrot.slane %v744, 6
  %v750 = vadd.f32 %v122, %v748
  %v751 = vxor.u32 %v750, 2147483648
  %v752 = vmul.f32 %v751, 1.442695
  %v753 = vpow.pop %v752
  %v754 = vadd.f32 %v753, 1.0
  %v755 = vrcp.pop %v754
  %v756 = vmul.f32 1.0, %v755
  %v757 = vtanh.pop %v750
  %v759 = vrot.slane %v663, 6
  %v761 = vmul.f32 %v756, %v759
  %763 = vrot.lane.b32.xlu0 %v757, 32
  %v764 = vpop.permute.xlu0 %763
  %v766 = vmul.f32 %v756, %v764
  %768 = vrot.lane.b32.xlu0 %v766, 32
  %v769 = vpop.permute.xlu0 %768
  %v771 = vadd.f32 %v761, %v769
  %v772 = vtanh.pop %v771
  %774 = vrot.lane.b32.xlu0 %v772, 32
  %v775 = vpop.permute.xlu0 %774
  %v777 = vmul.f32 %v756, %v775
  %779 = vrot.lane.b32.xlu0 %v777, 64
  %v780 = vpop.permute.xlu0 %779
  %782 = vst.msk [vmem:[#allocation2 + $0x8] sm:$0xc] %vm341, %v780
  %v783 = vrot.slane %v777, 2
  %784 = vrot.lane.b32.xlu0 %v783, 64
  %v785 = vpop.permute.xlu0 %784
  %v786 = vsel %vm129, %v785, 0
  %788 = vmatprep.subr.mxu0 0.0
  %789 = vmatpush1.msra.mxu0 0.0
  %790 = vmatprep.subr.mxu0 0.0
  %791 = vmatpush1.msra.mxu0 0.0
  %792 = vmatprep.subr.mxu0 0.0
  %793 = vmatpush1.msra.mxu0 0.0
  %794 = vmatprep.subr.mxu0 0.0
  %795 = vmatpush1.msra.mxu0 0.0
  %796 = vmatprep.subr.mxu0 0.0
  %797 = vmatpush1.msra.mxu0 0.0
  %798 = vmatprep.subr.mxu0 0.0
  %799 = vmatpush1.msra.mxu0 0.0
  %800 = vmatprep.subr.mxu0 0.0
  %801 = vmatpush1.msra.mxu0 0.0
  %802 = vmatprep.subr.mxu0 0.0
  %803 = vmatpush1.msra.mxu0 0.0
  %804 = vmatprep.subr.mxu0 0.0
  %805 = vmatpush1.msra.mxu0 0.0
  %806 = vmatprep.subr.mxu0 0.0
  %807 = vmatpush1.msra.mxu0 0.0
  %808 = vmatprep.subr.mxu0 0.0
  %809 = vmatpush1.msra.mxu0 0.0
  %810 = vmatprep.subr.mxu0 0.0
  %811 = vmatpush1.msra.mxu0 0.0
  %812 = vmatprep.subr.mxu0 0.0
  %813 = vmatpush1.msra.mxu0 %v128
  %814 = vmatprep.subr.mxu0 0.0
  %815 = vmatpush1.msra.mxu0 %v127
  %816 = vmatprep.subr.mxu0 0.0
  %817 = vmatpush1.msra.mxu0 %v126
  %818 = vmatprep.subr.mxu0 0.0
  %819 = vmatpush1.msra.mxu0 %v125
  %820 = vmatprep.subr.mxu0 0.0
  %821 = vmatpush2.msra.mxu0 0.0
  %822 = vmatprep.subr.mxu0 0.0
  %823 = vmatpush2.msra.mxu0 0.0
  %824 = vmatprep.subr.mxu0 0.0
  %825 = vmatpush2.msra.mxu0 0.0
  %826 = vmatprep.subr.mxu0 0.0
  %827 = vmatpush2.msra.mxu0 0.0
  %828 = vmatprep.subr.mxu0 0.0
  %829 = vmatpush2.msra.mxu0 0.0
  %830 = vmatprep.subr.mxu0 0.0
  %831 = vmatpush2.msra.mxu0 0.0
  %832 = vmatprep.subr.mxu0 0.0
  %833 = vmatpush2.msra.mxu0 0.0
  %834 = vmatprep.subr.mxu0 0.0
  %835 = vmatpush2.msra.mxu0 0.0
  %836 = vmatprep.subr.mxu0 0.0
  %837 = vmatpush2.msra.mxu0 0.0
  %838 = vmatprep.subr.mxu0 0.0
  %839 = vmatpush2.msra.mxu0 0.0
  %840 = vmatprep.subr.mxu0 0.0
  %841 = vmatpush2.msra.mxu0 0.0
  %842 = vmatprep.subr.mxu0 0.0
  %843 = vmatpush2.msra.mxu0 0.0
  %844 = vmatprep.subr.mxu0 0.0
  %845 = vmatpush2.msra.mxu0 0.0
  %846 = vmatprep.subr.mxu0 0.0
  %847 = vmatpush2.msra.mxu0 0.0
  %848 = vmatprep.subr.mxu0 0.0
  %849 = vmatpush2.msra.mxu0 0.0
  %850 = vmatprep.subr.mxu0 0.0
  %851 = vmatpush2.msra.mxu0 0.0
  %852 = vmatprep.mubr.f32.mxu0 0.0
  %853 = vmatmul.mubr.f32.gmra.mxu0 %v786
  %v854 = vpop.f32.mrf.mxu0
  %v855 = vadd.f32 0.0, %v854
  %v856 = vpop.f32.mrf.mxu0
  %857 = vdwg.mxu0
  %v859 = vrot.slane %v855, 4
  %v861 = vadd.f32 %v122, %v859
  %v862 = vxor.u32 %v861, 2147483648
  %v863 = vmul.f32 %v862, 1.442695
  %v864 = vpow.pop %v863
  %v865 = vadd.f32 %v864, 1.0
  %v866 = vrcp.pop %v865
  %v867 = vmul.f32 1.0, %v866
  %v868 = vtanh.pop %v861
  %v870 = vrot.slane %v771, 6
  %v872 = vmul.f32 %v867, %v870
  %874 = vrot.lane.b32.xlu0 %v868, 32
  %v875 = vpop.permute.xlu0 %874
  %v877 = vmul.f32 %v867, %v875
  %879 = vrot.lane.b32.xlu0 %v877, 32
  %v880 = vpop.permute.xlu0 %879
  %v882 = vadd.f32 %v872, %v880
  %v883 = vtanh.pop %v882
  %885 = vrot.lane.b32.xlu0 %v883, 32
  %v886 = vpop.permute.xlu0 %885
  %v888 = vmul.f32 %v867, %v886
  %890 = vrot.lane.b32.xlu0 %v888, 64
  %v891 = vpop.permute.xlu0 %890
  %893 = vst.msk [vmem:[#allocation2 + $0x8] sm:$0x30] %vm453, %v891
  %v894 = vrot.slane %v888, 4
  %895 = vrot.lane.b32.xlu0 %v894, 64
  %v896 = vpop.permute.xlu0 %895
  %v897 = vsel %vm129, %v896, 0
  %899 = vmatprep.subr.mxu0 0.0
  %900 = vmatpush1.msra.mxu0 0.0
  %901 = vmatprep.subr.mxu0 0.0
  %902 = vmatpush1.msra.mxu0 0.0
  %903 = vmatprep.subr.mxu0 0.0
  %904 = vmatpush1.msra.mxu0 0.0
  %905 = vmatprep.subr.mxu0 0.0
  %906 = vmatpush1.msra.mxu0 0.0
  %907 = vmatprep.subr.mxu0 0.0
  %908 = vmatpush1.msra.mxu0 0.0
  %909 = vmatprep.subr.mxu0 0.0
  %910 = vmatpush1.msra.mxu0 0.0
  %911 = vmatprep.subr.mxu0 0.0
  %912 = vmatpush1.msra.mxu0 0.0
  %913 = vmatprep.subr.mxu0 0.0
  %914 = vmatpush1.msra.mxu0 0.0
  %915 = vmatprep.subr.mxu0 0.0
  %916 = vmatpush1.msra.mxu0 0.0
  %917 = vmatprep.subr.mxu0 0.0
  %918 = vmatpush1.msra.mxu0 0.0
  %919 = vmatprep.subr.mxu0 0.0
  %920 = vmatpush1.msra.mxu0 0.0
  %921 = vmatprep.subr.mxu0 0.0
  %922 = vmatpush1.msra.mxu0 0.0
  %923 = vmatprep.subr.mxu0 0.0
  %924 = vmatpush1.msra.mxu0 %v128
  %925 = vmatprep.subr.mxu0 0.0
  %926 = vmatpush1.msra.mxu0 %v127
  %927 = vmatprep.subr.mxu0 0.0
  %928 = vmatpush1.msra.mxu0 %v126
  %929 = vmatprep.subr.mxu0 0.0
  %930 = vmatpush1.msra.mxu0 %v125
  %931 = vmatprep.subr.mxu0 0.0
  %932 = vmatpush2.msra.mxu0 0.0
  %933 = vmatprep.subr.mxu0 0.0
  %934 = vmatpush2.msra.mxu0 0.0
  %935 = vmatprep.subr.mxu0 0.0
  %936 = vmatpush2.msra.mxu0 0.0
  %937 = vmatprep.subr.mxu0 0.0
  %938 = vmatpush2.msra.mxu0 0.0
  %939 = vmatprep.subr.mxu0 0.0
  %940 = vmatpush2.msra.mxu0 0.0
  %941 = vmatprep.subr.mxu0 0.0
  %942 = vmatpush2.msra.mxu0 0.0
  %943 = vmatprep.subr.mxu0 0.0
  %944 = vmatpush2.msra.mxu0 0.0
  %945 = vmatprep.subr.mxu0 0.0
  %946 = vmatpush2.msra.mxu0 0.0
  %947 = vmatprep.subr.mxu0 0.0
  %948 = vmatpush2.msra.mxu0 0.0
  %949 = vmatprep.subr.mxu0 0.0
  %950 = vmatpush2.msra.mxu0 0.0
  %951 = vmatprep.subr.mxu0 0.0
  %952 = vmatpush2.msra.mxu0 0.0
  %953 = vmatprep.subr.mxu0 0.0
  %954 = vmatpush2.msra.mxu0 0.0
  %955 = vmatprep.subr.mxu0 0.0
  %956 = vmatpush2.msra.mxu0 0.0
  %957 = vmatprep.subr.mxu0 0.0
  %958 = vmatpush2.msra.mxu0 0.0
  %959 = vmatprep.subr.mxu0 0.0
  %960 = vmatpush2.msra.mxu0 0.0
  %961 = vmatprep.subr.mxu0 0.0
  %962 = vmatpush2.msra.mxu0 0.0
  %963 = vmatprep.mubr.f32.mxu0 0.0
  %964 = vmatmul.mubr.f32.gmra.mxu0 %v897
  %v965 = vpop.f32.mrf.mxu0
  %v966 = vadd.f32 0.0, %v965
  %v967 = vpop.f32.mrf.mxu0
  %968 = vdwg.mxu0
  %v970 = vrot.slane %v966, 2
  %v972 = vadd.f32 %v122, %v970
  %v973 = vxor.u32 %v972, 2147483648
  %v974 = vmul.f32 %v973, 1.442695
  %v975 = vpow.pop %v974
  %v976 = vadd.f32 %v975, 1.0
  %v977 = vrcp.pop %v976
  %v978 = vmul.f32 1.0, %v977
  %v979 = vtanh.pop %v972
  %v981 = vrot.slane %v882, 6
  %v983 = vmul.f32 %v978, %v981
  %985 = vrot.lane.b32.xlu0 %v979, 32
  %v986 = vpop.permute.xlu0 %985
  %v988 = vmul.f32 %v978, %v986
  %990 = vrot.lane.b32.xlu0 %v988, 32
  %v991 = vpop.permute.xlu0 %990
  %v993 = vadd.f32 %v983, %v991
  %v994 = vtanh.pop %v993
  %996 = vrot.lane.b32.xlu0 %v994, 32
  %v997 = vpop.permute.xlu0 %996
  %v999 = vmul.f32 %v978, %v997
  %1001 = vrot.lane.b32.xlu0 %v999, 64
  %v1002 = vpop.permute.xlu0 %1001
  %1004 = vst.msk [vmem:[#allocation2 + $0x8] sm:$0xc0] %vm565, %v1002
  %v1005 = vld [vmem:[#allocation2] sm:$0xff]
  %v1006 = vld [vmem:[#allocation2 + $0x8] sm:$0xff]
  %v1007 = vld [vmem:[%s4] sm:$0xff]
  %v1008 = vld [vmem:[%s4 + $0x8] sm:$0xff]
  %v1009 = vld [vmem:[%s4 + $0x10] sm:$0xff]
  %v1010 = vld [vmem:[%s4 + $0x18] sm:$0xff]
  %v1011 = vld [vmem:[%s6] sm:$0x1]
  %v1013 = vlaneseq
  %v1014 = vshrl.u32 %v1013, 7
  %v1015 = vsub.s32 0, %v1014
  %v1016 = vrot.slane %v1011, %v1015
  %v1019 = vsel %vm129, %v1005, 0
  %v1022 = vsel %vm129, %v1006, 0
  %1024 = vmatprep.subr.mxu0 0.0
  %1025 = vmatpush1.msra.mxu0 0.0
  %1026 = vmatprep.subr.mxu0 0.0
  %1027 = vmatpush1.msra.mxu0 0.0
  %1028 = vmatprep.subr.mxu0 0.0
  %1029 = vmatpush1.msra.mxu0 0.0
  %1030 = vmatprep.subr.mxu0 0.0
  %1031 = vmatpush1.msra.mxu0 0.0
  %1032 = vmatprep.subr.mxu0 0.0
  %1033 = vmatpush1.msra.mxu0 0.0
  %1034 = vmatprep.subr.mxu0 0.0
  %1035 = vmatpush1.msra.mxu0 0.0
  %1036 = vmatprep.subr.mxu0 0.0
  %1037 = vmatpush1.msra.mxu0 0.0
  %1038 = vmatprep.subr.mxu0 0.0
  %1039 = vmatpush1.msra.mxu0 0.0
  %1040 = vmatprep.subr.mxu0 0.0
  %1041 = vmatpush1.msra.mxu0 0.0
  %1042 = vmatprep.subr.mxu0 0.0
  %1043 = vmatpush1.msra.mxu0 0.0
  %1044 = vmatprep.subr.mxu0 0.0
  %1045 = vmatpush1.msra.mxu0 0.0
  %1046 = vmatprep.subr.mxu0 0.0
  %1047 = vmatpush1.msra.mxu0 0.0
  %1048 = vmatprep.subr.mxu0 0.0
  %1049 = vmatpush1.msra.mxu0 %v1010
  %1050 = vmatprep.subr.mxu0 0.0
  %1051 = vmatpush1.msra.mxu0 %v1009
  %1052 = vmatprep.subr.mxu0 0.0
  %1053 = vmatpush1.msra.mxu0 %v1008
  %1054 = vmatprep.subr.mxu0 0.0
  %1055 = vmatpush1.msra.mxu0 %v1007
  %1056 = vmatprep.subr.mxu0 0.0
  %1057 = vmatpush2.msra.mxu0 0.0
  %1058 = vmatprep.subr.mxu0 0.0
  %1059 = vmatpush2.msra.mxu0 0.0
  %1060 = vmatprep.subr.mxu0 0.0
  %1061 = vmatpush2.msra.mxu0 0.0
  %1062 = vmatprep.subr.mxu0 0.0
  %1063 = vmatpush2.msra.mxu0 0.0
  %1064 = vmatprep.subr.mxu0 0.0
  %1065 = vmatpush2.msra.mxu0 0.0
  %1066 = vmatprep.subr.mxu0 0.0
  %1067 = vmatpush2.msra.mxu0 0.0
  %1068 = vmatprep.subr.mxu0 0.0
  %1069 = vmatpush2.msra.mxu0 0.0
  %1070 = vmatprep.subr.mxu0 0.0
  %1071 = vmatpush2.msra.mxu0 0.0
  %1072 = vmatprep.subr.mxu0 0.0
  %1073 = vmatpush2.msra.mxu0 0.0
  %1074 = vmatprep.subr.mxu0 0.0
  %1075 = vmatpush2.msra.mxu0 0.0
  %1076 = vmatprep.subr.mxu0 0.0
  %1077 = vmatpush2.msra.mxu0 0.0
  %1078 = vmatprep.subr.mxu0 0.0
  %1079 = vmatpush2.msra.mxu0 0.0
  %1080 = vmatprep.subr.mxu0 0.0
  %1081 = vmatpush2.msra.mxu0 0.0
  %1082 = vmatprep.subr.mxu0 0.0
  %1083 = vmatpush2.msra.mxu0 0.0
  %1084 = vmatprep.subr.mxu0 0.0
  %1085 = vmatpush2.msra.mxu0 0.0
  %1086 = vmatprep.subr.mxu0 0.0
  %1087 = vmatpush2.msra.mxu0 0.0
  %1088 = vmatprep.mubr.f32.mxu0 0.0
  %1089 = vmatmul.mubr.f32.gmra.mxu0 %v1019
  %v1090 = vpop.f32.mrf.mxu0
  %v1091 = vadd.f32 %v1016, %v1090
  %v1092 = vpop.f32.mrf.mxu0
  %1093 = vmatprep.mubr.f32.mxu0 0.0
  %1094 = vmatmul.mubr.f32.gmra.mxu0 %v1022
  %v1095 = vpop.f32.mrf.mxu0
  %v1096 = vadd.f32 %v1016, %v1095
  %v1097 = vpop.f32.mrf.mxu0
  %1098 = vdwg.mxu0
  %v1099 = vld [vmem:[%s5] sm:$0xff]
  %v1100 = vld [vmem:[%s5 + $0x8] sm:$0xff]
  %v1101 = vld [vmem:[%s5 + $0x10] sm:$0xff]
  %v1102 = vld [vmem:[%s5 + $0x18] sm:$0xff]
  %1103 = vmatprep.subr.mxu0 0.0
  %1104 = vmatpush1.msra.mxu0 0.0
  %1105 = vmatprep.subr.mxu0 0.0
  %1106 = vmatpush1.msra.mxu0 0.0
  %1107 = vmatprep.subr.mxu0 0.0
  %1108 = vmatpush1.msra.mxu0 0.0
  %1109 = vmatprep.subr.mxu0 0.0
  %1110 = vmatpush1.msra.mxu0 0.0
  %1111 = vmatprep.subr.mxu0 0.0
  %1112 = vmatpush1.msra.mxu0 0.0
  %1113 = vmatprep.subr.mxu0 0.0
  %1114 = vmatpush1.msra.mxu0 0.0
  %1115 = vmatprep.subr.mxu0 0.0
  %1116 = vmatpush1.msra.mxu0 0.0
  %1117 = vmatprep.subr.mxu0 0.0
  %1118 = vmatpush1.msra.mxu0 0.0
  %1119 = vmatprep.subr.mxu0 0.0
  %1120 = vmatpush1.msra.mxu0 0.0
  %1121 = vmatprep.subr.mxu0 0.0
  %1122 = vmatpush1.msra.mxu0 0.0
  %1123 = vmatprep.subr.mxu0 0.0
  %1124 = vmatpush1.msra.mxu0 0.0
  %1125 = vmatprep.subr.mxu0 0.0
  %1126 = vmatpush1.msra.mxu0 0.0
  %1127 = vmatprep.subr.mxu0 0.0
  %1128 = vmatpush1.msra.mxu0 %v1102
  %1129 = vmatprep.subr.mxu0 0.0
  %1130 = vmatpush1.msra.mxu0 %v1101
  %1131 = vmatprep.subr.mxu0 0.0
  %1132 = vmatpush1.msra.mxu0 %v1100
  %1133 = vmatprep.subr.mxu0 0.0
  %1134 = vmatpush1.msra.mxu0 %v1099
  %1135 = vmatprep.subr.mxu0 0.0
  %1136 = vmatpush2.msra.mxu0 0.0
  %1137 = vmatprep.subr.mxu0 0.0
  %1138 = vmatpush2.msra.mxu0 0.0
  %1139 = vmatprep.subr.mxu0 0.0
  %1140 = vmatpush2.msra.mxu0 0.0
  %1141 = vmatprep.subr.mxu0 0.0
  %1142 = vmatpush2.msra.mxu0 0.0
  %1143 = vmatprep.subr.mxu0 0.0
  %1144 = vmatpush2.msra.mxu0 0.0
  %1145 = vmatprep.subr.mxu0 0.0
  %1146 = vmatpush2.msra.mxu0 0.0
  %1147 = vmatprep.subr.mxu0 0.0
  %1148 = vmatpush2.msra.mxu0 0.0
  %1149 = vmatprep.subr.mxu0 0.0
  %1150 = vmatpush2.msra.mxu0 0.0
  %1151 = vmatprep.subr.mxu0 0.0
  %1152 = vmatpush2.msra.mxu0 0.0
  %1153 = vmatprep.subr.mxu0 0.0
  %1154 = vmatpush2.msra.mxu0 0.0
  %1155 = vmatprep.subr.mxu0 0.0
  %1156 = vmatpush2.msra.mxu0 0.0
  %1157 = vmatprep.subr.mxu0 0.0
  %1158 = vmatpush2.msra.mxu0 0.0
  %1159 = vmatprep.subr.mxu0 0.0
  %1160 = vmatpush2.msra.mxu0 0.0
  %1161 = vmatprep.subr.mxu0 0.0
  %1162 = vmatpush2.msra.mxu0 0.0
  %1163 = vmatprep.subr.mxu0 0.0
  %1164 = vmatpush2.msra.mxu0 0.0
  %1165 = vmatprep.subr.mxu0 0.0
  %1166 = vmatpush2.msra.mxu0 0.0
  %1167 = vmatprep.mubr.f32.mxu0 0.0
  %1168 = vmatmul.mubr.f32.gmra.mxu0 %v131
  %v1169 = vpop.f32.mrf.mxu0
  %v1170 = vadd.f32 0.0, %v1169
  %v1171 = vpop.f32.mrf.mxu0
  %1172 = vdwg.mxu0
  %v1173 = vadd.f32 %v1091, %v1170
  %v1174 = vxor.u32 %v1173, 2147483648
  %v1175 = vmul.f32 %v1174, 1.442695
  %v1176 = vpow.pop %v1175
  %v1177 = vadd.f32 %v1176, 1.0
  %v1178 = vrcp.pop %v1177
  %v1179 = vmul.f32 1.0, %v1178
  %v1180 = vtanh.pop %v1173
  %v1181 = vmul.f32 %v1179, 0.0
  %1183 = vrot.lane.b32.xlu0 %v1180, 32
  %v1184 = vpop.permute.xlu0 %1183
  %v1186 = vmul.f32 %v1179, %v1184
  %1188 = vrot.lane.b32.xlu0 %v1186, 32
  %v1189 = vpop.permute.xlu0 %1188
  %v1191 = vadd.f32 %v1181, %v1189
  %v1192 = vtanh.pop %v1191
  %1194 = vrot.lane.b32.xlu0 %v1192, 32
  %v1195 = vpop.permute.xlu0 %1194
  %v1197 = vmul.f32 %v1179, %v1195
  %1199 = vrot.lane.b32.xlu0 %v1197, 64
  %v1200 = vpop.permute.xlu0 %1199
  %1202 = vst.msk [vmem:[#allocation3] sm:$0x3] %vm232, %v1200
  %v1203 = vsel %vm129, %v1200, 0
  %1205 = vmatprep.subr.mxu0 0.0
  %1206 = vmatpush1.msra.mxu0 0.0
  %1207 = vmatprep.subr.mxu0 0.0
  %1208 = vmatpush1.msra.mxu0 0.0
  %1209 = vmatprep.subr.mxu0 0.0
  %1210 = vmatpush1.msra.mxu0 0.0
  %1211 = vmatprep.subr.mxu0 0.0
  %1212 = vmatpush1.msra.mxu0 0.0
  %1213 = vmatprep.subr.mxu0 0.0
  %1214 = vmatpush1.msra.mxu0 0.0
  %1215 = vmatprep.subr.mxu0 0.0
  %1216 = vmatpush1.msra.mxu0 0.0
  %1217 = vmatprep.subr.mxu0 0.0
  %1218 = vmatpush1.msra.mxu0 0.0
  %1219 = vmatprep.subr.mxu0 0.0
  %1220 = vmatpush1.msra.mxu0 0.0
  %1221 = vmatprep.subr.mxu0 0.0
  %1222 = vmatpush1.msra.mxu0 0.0
  %1223 = vmatprep.subr.mxu0 0.0
  %1224 = vmatpush1.msra.mxu0 0.0
  %1225 = vmatprep.subr.mxu0 0.0
  %1226 = vmatpush1.msra.mxu0 0.0
  %1227 = vmatprep.subr.mxu0 0.0
  %1228 = vmatpush1.msra.mxu0 0.0
  %1229 = vmatprep.subr.mxu0 0.0
  %1230 = vmatpush1.msra.mxu0 %v1102
  %1231 = vmatprep.subr.mxu0 0.0
  %1232 = vmatpush1.msra.mxu0 %v1101
  %1233 = vmatprep.subr.mxu0 0.0
  %1234 = vmatpush1.msra.mxu0 %v1100
  %1235 = vmatprep.subr.mxu0 0.0
  %1236 = vmatpush1.msra.mxu0 %v1099
  %1237 = vmatprep.subr.mxu0 0.0
  %1238 = vmatpush2.msra.mxu0 0.0
  %1239 = vmatprep.subr.mxu0 0.0
  %1240 = vmatpush2.msra.mxu0 0.0
  %1241 = vmatprep.subr.mxu0 0.0
  %1242 = vmatpush2.msra.mxu0 0.0
  %1243 = vmatprep.subr.mxu0 0.0
  %1244 = vmatpush2.msra.mxu0 0.0
  %1245 = vmatprep.subr.mxu0 0.0
  %1246 = vmatpush2.msra.mxu0 0.0
  %1247 = vmatprep.subr.mxu0 0.0
  %1248 = vmatpush2.msra.mxu0 0.0
  %1249 = vmatprep.subr.mxu0 0.0
  %1250 = vmatpush2.msra.mxu0 0.0
  %1251 = vmatprep.subr.mxu0 0.0
  %1252 = vmatpush2.msra.mxu0 0.0
  %1253 = vmatprep.subr.mxu0 0.0
  %1254 = vmatpush2.msra.mxu0 0.0
  %1255 = vmatprep.subr.mxu0 0.0
  %1256 = vmatpush2.msra.mxu0 0.0
  %1257 = vmatprep.subr.mxu0 0.0
  %1258 = vmatpush2.msra.mxu0 0.0
  %1259 = vmatprep.subr.mxu0 0.0
  %1260 = vmatpush2.msra.mxu0 0.0
  %1261 = vmatprep.subr.mxu0 0.0
  %1262 = vmatpush2.msra.mxu0 0.0
  %1263 = vmatprep.subr.mxu0 0.0
  %1264 = vmatpush2.msra.mxu0 0.0
  %1265 = vmatprep.subr.mxu0 0.0
  %1266 = vmatpush2.msra.mxu0 0.0
  %1267 = vmatprep.subr.mxu0 0.0
  %1268 = vmatpush2.msra.mxu0 0.0
  %1269 = vmatprep.mubr.f32.mxu0 0.0
  %1270 = vmatmul.mubr.f32.gmra.mxu0 %v1203
  %v1271 = vpop.f32.mrf.mxu0
  %v1272 = vadd.f32 0.0, %v1271
  %v1273 = vpop.f32.mrf.mxu0
  %1274 = vdwg.mxu0
  %v1276 = vrot.slane %v1272, 6
  %v1278 = vadd.f32 %v1091, %v1276
  %v1279 = vxor.u32 %v1278, 2147483648
  %v1280 = vmul.f32 %v1279, 1.442695
  %v1281 = vpow.pop %v1280
  %v1282 = vadd.f32 %v1281, 1.0
  %v1283 = vrcp.pop %v1282
  %v1284 = vmul.f32 1.0, %v1283
  %v1285 = vtanh.pop %v1278
  %v1287 = vrot.slane %v1191, 6
  %v1289 = vmul.f32 %v1284, %v1287
  %1291 = vrot.lane.b32.xlu0 %v1285, 32
  %v1292 = vpop.permute.xlu0 %1291
  %v1294 = vmul.f32 %v1284, %v1292
  %1296 = vrot.lane.b32.xlu0 %v1294, 32
  %v1297 = vpop.permute.xlu0 %1296
  %v1299 = vadd.f32 %v1289, %v1297
  %v1300 = vtanh.pop %v1299
  %1302 = vrot.lane.b32.xlu0 %v1300, 32
  %v1303 = vpop.permute.xlu0 %1302
  %v1305 = vmul.f32 %v1284, %v1303
  %1307 = vrot.lane.b32.xlu0 %v1305, 64
  %v1308 = vpop.permute.xlu0 %1307
  %1310 = vst.msk [vmem:[#allocation3] sm:$0xc] %vm341, %v1308
  %v1311 = vrot.slane %v1305, 2
  %1312 = vrot.lane.b32.xlu0 %v1311, 64
  %v1313 = vpop.permute.xlu0 %1312
  %v1314 = vsel %vm129, %v1313, 0
  %1316 = vmatprep.subr.mxu0 0.0
  %1317 = vmatpush1.msra.mxu0 0.0
  %1318 = vmatprep.subr.mxu0 0.0
  %1319 = vmatpush1.msra.mxu0 0.0
  %1320 = vmatprep.subr.mxu0 0.0
  %1321 = vmatpush1.msra.mxu0 0.0
  %1322 = vmatprep.subr.mxu0 0.0
  %1323 = vmatpush1.msra.mxu0 0.0
  %1324 = vmatprep.subr.mxu0 0.0
  %1325 = vmatpush1.msra.mxu0 0.0
  %1326 = vmatprep.subr.mxu0 0.0
  %1327 = vmatpush1.msra.mxu0 0.0
  %1328 = vmatprep.subr.mxu0 0.0
  %1329 = vmatpush1.msra.mxu0 0.0
  %1330 = vmatprep.subr.mxu0 0.0
  %1331 = vmatpush1.msra.mxu0 0.0
  %1332 = vmatprep.subr.mxu0 0.0
  %1333 = vmatpush1.msra.mxu0 0.0
  %1334 = vmatprep.subr.mxu0 0.0
  %1335 = vmatpush1.msra.mxu0 0.0
  %1336 = vmatprep.subr.mxu0 0.0
  %1337 = vmatpush1.msra.mxu0 0.0
  %1338 = vmatprep.subr.mxu0 0.0
  %1339 = vmatpush1.msra.mxu0 0.0
  %1340 = vmatprep.subr.mxu0 0.0
  %1341 = vmatpush1.msra.mxu0 %v1102
  %1342 = vmatprep.subr.mxu0 0.0
  %1343 = vmatpush1.msra.mxu0 %v1101
  %1344 = vmatprep.subr.mxu0 0.0
  %1345 = vmatpush1.msra.mxu0 %v1100
  %1346 = vmatprep.subr.mxu0 0.0
  %1347 = vmatpush1.msra.mxu0 %v1099
  %1348 = vmatprep.subr.mxu0 0.0
  %1349 = vmatpush2.msra.mxu0 0.0
  %1350 = vmatprep.subr.mxu0 0.0
  %1351 = vmatpush2.msra.mxu0 0.0
  %1352 = vmatprep.subr.mxu0 0.0
  %1353 = vmatpush2.msra.mxu0 0.0
  %1354 = vmatprep.subr.mxu0 0.0
  %1355 = vmatpush2.msra.mxu0 0.0
  %1356 = vmatprep.subr.mxu0 0.0
  %1357 = vmatpush2.msra.mxu0 0.0
  %1358 = vmatprep.subr.mxu0 0.0
  %1359 = vmatpush2.msra.mxu0 0.0
  %1360 = vmatprep.subr.mxu0 0.0
  %1361 = vmatpush2.msra.mxu0 0.0
  %1362 = vmatprep.subr.mxu0 0.0
  %1363 = vmatpush2.msra.mxu0 0.0
  %1364 = vmatprep.subr.mxu0 0.0
  %1365 = vmatpush2.msra.mxu0 0.0
  %1366 = vmatprep.subr.mxu0 0.0
  %1367 = vmatpush2.msra.mxu0 0.0
  %1368 = vmatprep.subr.mxu0 0.0
  %1369 = vmatpush2.msra.mxu0 0.0
  %1370 = vmatprep.subr.mxu0 0.0
  %1371 = vmatpush2.msra.mxu0 0.0
  %1372 = vmatprep.subr.mxu0 0.0
  %1373 = vmatpush2.msra.mxu0 0.0
  %1374 = vmatprep.subr.mxu0 0.0
  %1375 = vmatpush2.msra.mxu0 0.0
  %1376 = vmatprep.subr.mxu0 0.0
  %1377 = vmatpush2.msra.mxu0 0.0
  %1378 = vmatprep.subr.mxu0 0.0
  %1379 = vmatpush2.msra.mxu0 0.0
  %1380 = vmatprep.mubr.f32.mxu0 0.0
  %1381 = vmatmul.mubr.f32.gmra.mxu0 %v1314
  %v1382 = vpop.f32.mrf.mxu0
  %v1383 = vadd.f32 0.0, %v1382
  %v1384 = vpop.f32.mrf.mxu0
  %1385 = vdwg.mxu0
  %v1387 = vrot.slane %v1383, 4
  %v1389 = vadd.f32 %v1091, %v1387
  %v1390 = vxor.u32 %v1389, 2147483648
  %v1391 = vmul.f32 %v1390, 1.442695
  %v1392 = vpow.pop %v1391
  %v1393 = vadd.f32 %v1392, 1.0
  %v1394 = vrcp.pop %v1393
  %v1395 = vmul.f32 1.0, %v1394
  %v1396 = vtanh.pop %v1389
  %v1398 = vrot.slane %v1299, 6
  %v1400 = vmul.f32 %v1395, %v1398
  %1402 = vrot.lane.b32.xlu0 %v1396, 32
  %v1403 = vpop.permute.xlu0 %1402
  %v1405 = vmul.f32 %v1395, %v1403
  %1407 = vrot.lane.b32.xlu0 %v1405, 32
  %v1408 = vpop.permute.xlu0 %1407
  %v1410 = vadd.f32 %v1400, %v1408
  %v1411 = vtanh.pop %v1410
  %1413 = vrot.lane.b32.xlu0 %v1411, 32
  %v1414 = vpop.permute.xlu0 %1413
  %v1416 = vmul.f32 %v1395, %v1414
  %1418 = vrot.lane.b32.xlu0 %v1416, 64
  %v1419 = vpop.permute.xlu0 %1418
  %1421 = vst.msk [vmem:[#allocation3] sm:$0x30] %vm453, %v1419
  %v1422 = vrot.slane %v1416, 4
  %1423 = vrot.lane.b32.xlu0 %v1422, 64
  %v1424 = vpop.permute.xlu0 %1423
  %v1425 = vsel %vm129, %v1424, 0
  %1427 = vmatprep.subr.mxu0 0.0
  %1428 = vmatpush1.msra.mxu0 0.0
  %1429 = vmatprep.subr.mxu0 0.0
  %1430 = vmatpush1.msra.mxu0 0.0
  %1431 = vmatprep.subr.mxu0 0.0
  %1432 = vmatpush1.msra.mxu0 0.0
  %1433 = vmatprep.subr.mxu0 0.0
  %1434 = vmatpush1.msra.mxu0 0.0
  %1435 = vmatprep.subr.mxu0 0.0
  %1436 = vmatpush1.msra.mxu0 0.0
  %1437 = vmatprep.subr.mxu0 0.0
  %1438 = vmatpush1.msra.mxu0 0.0
  %1439 = vmatprep.subr.mxu0 0.0
  %1440 = vmatpush1.msra.mxu0 0.0
  %1441 = vmatprep.subr.mxu0 0.0
  %1442 = vmatpush1.msra.mxu0 0.0
  %1443 = vmatprep.subr.mxu0 0.0
  %1444 = vmatpush1.msra.mxu0 0.0
  %1445 = vmatprep.subr.mxu0 0.0
  %1446 = vmatpush1.msra.mxu0 0.0
  %1447 = vmatprep.subr.mxu0 0.0
  %1448 = vmatpush1.msra.mxu0 0.0
  %1449 = vmatprep.subr.mxu0 0.0
  %1450 = vmatpush1.msra.mxu0 0.0
  %1451 = vmatprep.subr.mxu0 0.0
  %1452 = vmatpush1.msra.mxu0 %v1102
  %1453 = vmatprep.subr.mxu0 0.0
  %1454 = vmatpush1.msra.mxu0 %v1101
  %1455 = vmatprep.subr.mxu0 0.0
  %1456 = vmatpush1.msra.mxu0 %v1100
  %1457 = vmatprep.subr.mxu0 0.0
  %1458 = vmatpush1.msra.mxu0 %v1099
  %1459 = vmatprep.subr.mxu0 0.0
  %1460 = vmatpush2.msra.mxu0 0.0
  %1461 = vmatprep.subr.mxu0 0.0
  %1462 = vmatpush2.msra.mxu0 0.0
  %1463 = vmatprep.subr.mxu0 0.0
  %1464 = vmatpush2.msra.mxu0 0.0
  %1465 = vmatprep.subr.mxu0 0.0
  %1466 = vmatpush2.msra.mxu0 0.0
  %1467 = vmatprep.subr.mxu0 0.0
  %1468 = vmatpush2.msra.mxu0 0.0
  %1469 = vmatprep.subr.mxu0 0.0
  %1470 = vmatpush2.msra.mxu0 0.0
  %1471 = vmatprep.subr.mxu0 0.0
  %1472 = vmatpush2.msra.mxu0 0.0
  %1473 = vmatprep.subr.mxu0 0.0
  %1474 = vmatpush2.msra.mxu0 0.0
  %1475 = vmatprep.subr.mxu0 0.0
  %1476 = vmatpush2.msra.mxu0 0.0
  %1477 = vmatprep.subr.mxu0 0.0
  %1478 = vmatpush2.msra.mxu0 0.0
  %1479 = vmatprep.subr.mxu0 0.0
  %1480 = vmatpush2.msra.mxu0 0.0
  %1481 = vmatprep.subr.mxu0 0.0
  %1482 = vmatpush2.msra.mxu0 0.0
  %1483 = vmatprep.subr.mxu0 0.0
  %1484 = vmatpush2.msra.mxu0 0.0
  %1485 = vmatprep.subr.mxu0 0.0
  %1486 = vmatpush2.msra.mxu0 0.0
  %1487 = vmatprep.subr.mxu0 0.0
  %1488 = vmatpush2.msra.mxu0 0.0
  %1489 = vmatprep.subr.mxu0 0.0
  %1490 = vmatpush2.msra.mxu0 0.0
  %1491 = vmatprep.mubr.f32.mxu0 0.0
  %1492 = vmatmul.mubr.f32.gmra.mxu0 %v1425
  %v1493 = vpop.f32.mrf.mxu0
  %v1494 = vadd.f32 0.0, %v1493
  %v1495 = vpop.f32.mrf.mxu0
  %1496 = vdwg.mxu0
  %v1498 = vrot.slane %v1494, 2
  %v1500 = vadd.f32 %v1091, %v1498
  %v1501 = vxor.u32 %v1500, 2147483648
  %v1502 = vmul.f32 %v1501, 1.442695
  %v1503 = vpow.pop %v1502
  %v1504 = vadd.f32 %v1503, 1.0
  %v1505 = vrcp.pop %v1504
  %v1506 = vmul.f32 1.0, %v1505
  %v1507 = vtanh.pop %v1500
  %v1509 = vrot.slane %v1410, 6
  %v1511 = vmul.f32 %v1506, %v1509
  %1513 = vrot.lane.b32.xlu0 %v1507, 32
  %v1514 = vpop.permute.xlu0 %1513
  %v1516 = vmul.f32 %v1506, %v1514
  %1518 = vrot.lane.b32.xlu0 %v1516, 32
  %v1519 = vpop.permute.xlu0 %1518
  %v1521 = vadd.f32 %v1511, %v1519
  %v1522 = vtanh.pop %v1521
  %1524 = vrot.lane.b32.xlu0 %v1522, 32
  %v1525 = vpop.permute.xlu0 %1524
  %v1527 = vmul.f32 %v1506, %v1525
  %1529 = vrot.lane.b32.xlu0 %v1527, 64
  %v1530 = vpop.permute.xlu0 %1529
  %1532 = vst.msk [vmem:[#allocation3] sm:$0xc0] %vm565, %v1530
  %v1533 = vrot.slane %v1527, 6
  %1534 = vrot.lane.b32.xlu0 %v1533, 64
  %v1535 = vpop.permute.xlu0 %1534
  %v1536 = vsel %vm129, %v1535, 0
  %1538 = vmatprep.subr.mxu0 0.0
  %1539 = vmatpush1.msra.mxu0 0.0
  %1540 = vmatprep.subr.mxu0 0.0
  %1541 = vmatpush1.msra.mxu0 0.0
  %1542 = vmatprep.subr.mxu0 0.0
  %1543 = vmatpush1.msra.mxu0 0.0
  %1544 = vmatprep.subr.mxu0 0.0
  %1545 = vmatpush1.msra.mxu0 0.0
  %1546 = vmatprep.subr.mxu0 0.0
  %1547 = vmatpush1.msra.mxu0 0.0
  %1548 = vmatprep.subr.mxu0 0.0
  %1549 = vmatpush1.msra.mxu0 0.0
  %1550 = vmatprep.subr.mxu0 0.0
  %1551 = vmatpush1.msra.mxu0 0.0
  %1552 = vmatprep.subr.mxu0 0.0
  %1553 = vmatpush1.msra.mxu0 0.0
  %1554 = vmatprep.subr.mxu0 0.0
  %1555 = vmatpush1.msra.mxu0 0.0
  %1556 = vmatprep.subr.mxu0 0.0
  %1557 = vmatpush1.msra.mxu0 0.0
  %1558 = vmatprep.subr.mxu0 0.0
  %1559 = vmatpush1.msra.mxu0 0.0
  %1560 = vmatprep.subr.mxu0 0.0
  %1561 = vmatpush1.msra.mxu0 0.0
  %1562 = vmatprep.subr.mxu0 0.0
  %1563 = vmatpush1.msra.mxu0 %v1102
  %1564 = vmatprep.subr.mxu0 0.0
  %1565 = vmatpush1.msra.mxu0 %v1101
  %1566 = vmatprep.subr.mxu0 0.0
  %1567 = vmatpush1.msra.mxu0 %v1100
  %1568 = vmatprep.subr.mxu0 0.0
  %1569 = vmatpush1.msra.mxu0 %v1099
  %1570 = vmatprep.subr.mxu0 0.0
  %1571 = vmatpush2.msra.mxu0 0.0
  %1572 = vmatprep.subr.mxu0 0.0
  %1573 = vmatpush2.msra.mxu0 0.0
  %1574 = vmatprep.subr.mxu0 0.0
  %1575 = vmatpush2.msra.mxu0 0.0
  %1576 = vmatprep.subr.mxu0 0.0
  %1577 = vmatpush2.msra.mxu0 0.0
  %1578 = vmatprep.subr.mxu0 0.0
  %1579 = vmatpush2.msra.mxu0 0.0
  %1580 = vmatprep.subr.mxu0 0.0
  %1581 = vmatpush2.msra.mxu0 0.0
  %1582 = vmatprep.subr.mxu0 0.0
  %1583 = vmatpush2.msra.mxu0 0.0
  %1584 = vmatprep.subr.mxu0 0.0
  %1585 = vmatpush2.msra.mxu0 0.0
  %1586 = vmatprep.subr.mxu0 0.0
  %1587 = vmatpush2.msra.mxu0 0.0
  %1588 = vmatprep.subr.mxu0 0.0
  %1589 = vmatpush2.msra.mxu0 0.0
  %1590 = vmatprep.subr.mxu0 0.0
  %1591 = vmatpush2.msra.mxu0 0.0
  %1592 = vmatprep.subr.mxu0 0.0
  %1593 = vmatpush2.msra.mxu0 0.0
  %1594 = vmatprep.subr.mxu0 0.0
  %1595 = vmatpush2.msra.mxu0 0.0
  %1596 = vmatprep.subr.mxu0 0.0
  %1597 = vmatpush2.msra.mxu0 0.0
  %1598 = vmatprep.subr.mxu0 0.0
  %1599 = vmatpush2.msra.mxu0 0.0
  %1600 = vmatprep.subr.mxu0 0.0
  %1601 = vmatpush2.msra.mxu0 0.0
  %1602 = vmatprep.mubr.f32.mxu0 0.0
  %1603 = vmatmul.mubr.f32.gmra.mxu0 %v1536
  %v1604 = vpop.f32.mrf.mxu0
  %v1605 = vadd.f32 0.0, %v1604
  %v1606 = vpop.f32.mrf.mxu0
  %1607 = vdwg.mxu0
  %v1608 = vadd.f32 %v1096, %v1605
  %v1609 = vxor.u32 %v1608, 2147483648
  %v1610 = vmul.f32 %v1609, 1.442695
  %v1611 = vpow.pop %v1610
  %v1612 = vadd.f32 %v1611, 1.0
  %v1613 = vrcp.pop %v1612
  %v1614 = vmul.f32 1.0, %v1613
  %v1615 = vtanh.pop %v1608
  %v1617 = vrot.slane %v1521, 6
  %v1619 = vmul.f32 %v1614, %v1617
  %1621 = vrot.lane.b32.xlu0 %v1615, 32
  %v1622 = vpop.permute.xlu0 %1621
  %v1624 = vmul.f32 %v1614, %v1622
  %1626 = vrot.lane.b32.xlu0 %v1624, 32
  %v1627 = vpop.permute.xlu0 %1626
  %v1629 = vadd.f32 %v1619, %v1627
  %v1630 = vtanh.pop %v1629
  %1632 = vrot.lane.b32.xlu0 %v1630, 32
  %v1633 = vpop.permute.xlu0 %1632
  %v1635 = vmul.f32 %v1614, %v1633
  %1637 = vrot.lane.b32.xlu0 %v1635, 64
  %v1638 = vpop.permute.xlu0 %1637
  %1640 = vst.msk [vmem:[#allocation3 + $0x8] sm:$0x3] %vm232, %v1638
  %v1641 = vsel %vm129, %v1638, 0
  %1643 = vmatprep.subr.mxu0 0.0
  %1644 = vmatpush1.msra.mxu0 0.0
  %1645 = vmatprep.subr.mxu0 0.0
  %1646 = vmatpush1.msra.mxu0 0.0
  %1647 = vmatprep.subr.mxu0 0.0
  %1648 = vmatpush1.msra.mxu0 0.0
  %1649 = vmatprep.subr.mxu0 0.0
  %1650 = vmatpush1.msra.mxu0 0.0
  %1651 = vmatprep.subr.mxu0 0.0
  %1652 = vmatpush1.msra.mxu0 0.0
  %1653 = vmatprep.subr.mxu0 0.0
  %1654 = vmatpush1.msra.mxu0 0.0
  %1655 = vmatprep.subr.mxu0 0.0
  %1656 = vmatpush1.msra.mxu0 0.0
  %1657 = vmatprep.subr.mxu0 0.0
  %1658 = vmatpush1.msra.mxu0 0.0
  %1659 = vmatprep.subr.mxu0 0.0
  %1660 = vmatpush1.msra.mxu0 0.0
  %1661 = vmatprep.subr.mxu0 0.0
  %1662 = vmatpush1.msra.mxu0 0.0
  %1663 = vmatprep.subr.mxu0 0.0
  %1664 = vmatpush1.msra.mxu0 0.0
  %1665 = vmatprep.subr.mxu0 0.0
  %1666 = vmatpush1.msra.mxu0 0.0
  %1667 = vmatprep.subr.mxu0 0.0
  %1668 = vmatpush1.msra.mxu0 %v1102
  %1669 = vmatprep.subr.mxu0 0.0
  %1670 = vmatpush1.msra.mxu0 %v1101
  %1671 = vmatprep.subr.mxu0 0.0
  %1672 = vmatpush1.msra.mxu0 %v1100
  %1673 = vmatprep.subr.mxu0 0.0
  %1674 = vmatpush1.msra.mxu0 %v1099
  %1675 = vmatprep.subr.mxu0 0.0
  %1676 = vmatpush2.msra.mxu0 0.0
  %1677 = vmatprep.subr.mxu0 0.0
  %1678 = vmatpush2.msra.mxu0 0.0
  %1679 = vmatprep.subr.mxu0 0.0
  %1680 = vmatpush2.msra.mxu0 0.0
  %1681 = vmatprep.subr.mxu0 0.0
  %1682 = vmatpush2.msra.mxu0 0.0
  %1683 = vmatprep.subr.mxu0 0.0
  %1684 = vmatpush2.msra.mxu0 0.0
  %1685 = vmatprep.subr.mxu0 0.0
  %1686 = vmatpush2.msra.mxu0 0.0
  %1687 = vmatprep.subr.mxu0 0.0
  %1688 = vmatpush2.msra.mxu0 0.0
  %1689 = vmatprep.subr.mxu0 0.0
  %1690 = vmatpush2.msra.mxu0 0.0
  %1691 = vmatprep.subr.mxu0 0.0
  %1692 = vmatpush2.msra.mxu0 0.0
  %1693 = vmatprep.subr.mxu0 0.0
  %1694 = vmatpush2.msra.mxu0 0.0
  %1695 = vmatprep.subr.mxu0 0.0
  %1696 = vmatpush2.msra.mxu0 0.0
  %1697 = vmatprep.subr.mxu0 0.0
  %1698 = vmatpush2.msra.mxu0 0.0
  %1699 = vmatprep.subr.mxu0 0.0
  %1700 = vmatpush2.msra.mxu0 0.0
  %1701 = vmatprep.subr.mxu0 0.0
  %1702 = vmatpush2.msra.mxu0 0.0
  %1703 = vmatprep.subr.mxu0 0.0
  %1704 = vmatpush2.msra.mxu0 0.0
  %1705 = vmatprep.subr.mxu0 0.0
  %1706 = vmatpush2.msra.mxu0 0.0
  %1707 = vmatprep.mubr.f32.mxu0 0.0
  %1708 = vmatmul.mubr.f32.gmra.mxu0 %v1641
  %v1709 = vpop.f32.mrf.mxu0
  %v1710 = vadd.f32 0.0, %v1709
  %v1711 = vpop.f32.mrf.mxu0
  %1712 = vdwg.mxu0
  %v1714 = vrot.slane %v1710, 6
  %v1716 = vadd.f32 %v1096, %v1714
  %v1717 = vxor.u32 %v1716, 2147483648
  %v1718 = vmul.f32 %v1717, 1.442695
  %v1719 = vpow.pop %v1718
  %v1720 = vadd.f32 %v1719, 1.0
  %v1721 = vrcp.pop %v1720
  %v1722 = vmul.f32 1.0, %v1721
  %v1723 = vtanh.pop %v1716
  %v1725 = vrot.slane %v1629, 6
  %v1727 = vmul.f32 %v1722, %v1725
  %1729 = vrot.lane.b32.xlu0 %v1723, 32
  %v1730 = vpop.permute.xlu0 %1729
  %v1732 = vmul.f32 %v1722, %v1730
  %1734 = vrot.lane.b32.xlu0 %v1732, 32
  %v1735 = vpop.permute.xlu0 %1734
  %v1737 = vadd.f32 %v1727, %v1735
  %v1738 = vtanh.pop %v1737
  %1740 = vrot.lane.b32.xlu0 %v1738, 32
  %v1741 = vpop.permute.xlu0 %1740
  %v1743 = vmul.f32 %v1722, %v1741
  %1745 = vrot.lane.b32.xlu0 %v1743, 64
  %v1746 = vpop.permute.xlu0 %1745
  %1748 = vst.msk [vmem:[#allocation3 + $0x8] sm:$0xc] %vm341, %v1746
  %v1749 = vrot.slane %v1743, 2
  %1750 = vrot.lane.b32.xlu0 %v1749, 64
  %v1751 = vpop.permute.xlu0 %1750
  %v1752 = vsel %vm129, %v1751, 0
  %1754 = vmatprep.subr.mxu0 0.0
  %1755 = vmatpush1.msra.mxu0 0.0
  %1756 = vmatprep.subr.mxu0 0.0
  %1757 = vmatpush1.msra.mxu0 0.0
  %1758 = vmatprep.subr.mxu0 0.0
  %1759 = vmatpush1.msra.mxu0 0.0
  %1760 = vmatprep.subr.mxu0 0.0
  %1761 = vmatpush1.msra.mxu0 0.0
  %1762 = vmatprep.subr.mxu0 0.0
  %1763 = vmatpush1.msra.mxu0 0.0
  %1764 = vmatprep.subr.mxu0 0.0
  %1765 = vmatpush1.msra.mxu0 0.0
  %1766 = vmatprep.subr.mxu0 0.0
  %1767 = vmatpush1.msra.mxu0 0.0
  %1768 = vmatprep.subr.mxu0 0.0
  %1769 = vmatpush1.msra.mxu0 0.0
  %1770 = vmatprep.subr.mxu0 0.0
  %1771 = vmatpush1.msra.mxu0 0.0
  %1772 = vmatprep.subr.mxu0 0.0
  %1773 = vmatpush1.msra.mxu0 0.0
  %1774 = vmatprep.subr.mxu0 0.0
  %1775 = vmatpush1.msra.mxu0 0.0
  %1776 = vmatprep.subr.mxu0 0.0
  %1777 = vmatpush1.msra.mxu0 0.0
  %1778 = vmatprep.subr.mxu0 0.0
  %1779 = vmatpush1.msra.mxu0 %v1102
  %1780 = vmatprep.subr.mxu0 0.0
  %1781 = vmatpush1.msra.mxu0 %v1101
  %1782 = vmatprep.subr.mxu0 0.0
  %1783 = vmatpush1.msra.mxu0 %v1100
  %1784 = vmatprep.subr.mxu0 0.0
  %1785 = vmatpush1.msra.mxu0 %v1099
  %1786 = vmatprep.subr.mxu0 0.0
  %1787 = vmatpush2.msra.mxu0 0.0
  %1788 = vmatprep.subr.mxu0 0.0
  %1789 = vmatpush2.msra.mxu0 0.0
  %1790 = vmatprep.subr.mxu0 0.0
  %1791 = vmatpush2.msra.mxu0 0.0
  %1792 = vmatprep.subr.mxu0 0.0
  %1793 = vmatpush2.msra.mxu0 0.0
  %1794 = vmatprep.subr.mxu0 0.0
  %1795 = vmatpush2.msra.mxu0 0.0
  %1796 = vmatprep.subr.mxu0 0.0
  %1797 = vmatpush2.msra.mxu0 0.0
  %1798 = vmatprep.subr.mxu0 0.0
  %1799 = vmatpush2.msra.mxu0 0.0
  %1800 = vmatprep.subr.mxu0 0.0
  %1801 = vmatpush2.msra.mxu0 0.0
  %1802 = vmatprep.subr.mxu0 0.0
  %1803 = vmatpush2.msra.mxu0 0.0
  %1804 = vmatprep.subr.mxu0 0.0
  %1805 = vmatpush2.msra.mxu0 0.0
  %1806 = vmatprep.subr.mxu0 0.0
  %1807 = vmatpush2.msra.mxu0 0.0
  %1808 = vmatprep.subr.mxu0 0.0
  %1809 = vmatpush2.msra.mxu0 0.0
  %1810 = vmatprep.subr.mxu0 0.0
  %1811 = vmatpush2.msra.mxu0 0.0
  %1812 = vmatprep.subr.mxu0 0.0
  %1813 = vmatpush2.msra.mxu0 0.0
  %1814 = vmatprep.subr.mxu0 0.0
  %1815 = vmatpush2.msra.mxu0 0.0
  %1816 = vmatprep.subr.mxu0 0.0
  %1817 = vmatpush2.msra.mxu0 0.0
  %1818 = vmatprep.mubr.f32.mxu0 0.0
  %1819 = vmatmul.mubr.f32.gmra.mxu0 %v1752
  %v1820 = vpop.f32.mrf.mxu0
  %v1821 = vadd.f32 0.0, %v1820
  %v1822 = vpop.f32.mrf.mxu0
  %1823 = vdwg.mxu0
  %v1825 = vrot.slane %v1821, 4
  %v1827 = vadd.f32 %v1096, %v1825
  %v1828 = vxor.u32 %v1827, 2147483648
  %v1829 = vmul.f32 %v1828, 1.442695
  %v1830 = vpow.pop %v1829
  %v1831 = vadd.f32 %v1830, 1.0
  %v1832 = vrcp.pop %v1831
  %v1833 = vmul.f32 1.0, %v1832
  %v1834 = vtanh.pop %v1827
  %v1836 = vrot.slane %v1737, 6
  %v1838 = vmul.f32 %v1833, %v1836
  %1840 = vrot.lane.b32.xlu0 %v1834, 32
  %v1841 = vpop.permute.xlu0 %1840
  %v1843 = vmul.f32 %v1833, %v1841
  %1845 = vrot.lane.b32.xlu0 %v1843, 32
  %v1846 = vpop.permute.xlu0 %1845
  %v1848 = vadd.f32 %v1838, %v1846
  %v1849 = vtanh.pop %v1848
  %1851 = vrot.lane.b32.xlu0 %v1849, 32
  %v1852 = vpop.permute.xlu0 %1851
  %v1854 = vmul.f32 %v1833, %v1852
  %1856 = vrot.lane.b32.xlu0 %v1854, 64
  %v1857 = vpop.permute.xlu0 %1856
  %1859 = vst.msk [vmem:[#allocation3 + $0x8] sm:$0x30] %vm453, %v1857
  %v1860 = vrot.slane %v1854, 4
  %1861 = vrot.lane.b32.xlu0 %v1860, 64
  %v1862 = vpop.permute.xlu0 %1861
  %v1863 = vsel %vm129, %v1862, 0
  %1865 = vmatprep.subr.mxu0 0.0
  %1866 = vmatpush1.msra.mxu0 0.0
  %1867 = vmatprep.subr.mxu0 0.0
  %1868 = vmatpush1.msra.mxu0 0.0
  %1869 = vmatprep.subr.mxu0 0.0
  %1870 = vmatpush1.msra.mxu0 0.0
  %1871 = vmatprep.subr.mxu0 0.0
  %1872 = vmatpush1.msra.mxu0 0.0
  %1873 = vmatprep.subr.mxu0 0.0
  %1874 = vmatpush1.msra.mxu0 0.0
  %1875 = vmatprep.subr.mxu0 0.0
  %1876 = vmatpush1.msra.mxu0 0.0
  %1877 = vmatprep.subr.mxu0 0.0
  %1878 = vmatpush1.msra.mxu0 0.0
  %1879 = vmatprep.subr.mxu0 0.0
  %1880 = vmatpush1.msra.mxu0 0.0
  %1881 = vmatprep.subr.mxu0 0.0
  %1882 = vmatpush1.msra.mxu0 0.0
  %1883 = vmatprep.subr.mxu0 0.0
  %1884 = vmatpush1.msra.mxu0 0.0
  %1885 = vmatprep.subr.mxu0 0.0
  %1886 = vmatpush1.msra.mxu0 0.0
  %1887 = vmatprep.subr.mxu0 0.0
  %1888 = vmatpush1.msra.mxu0 0.0
  %1889 = vmatprep.subr.mxu0 0.0
  %1890 = vmatpush1.msra.mxu0 %v1102
  %1891 = vmatprep.subr.mxu0 0.0
  %1892 = vmatpush1.msra.mxu0 %v1101
  %1893 = vmatprep.subr.mxu0 0.0
  %1894 = vmatpush1.msra.mxu0 %v1100
  %1895 = vmatprep.subr.mxu0 0.0
  %1896 = vmatpush1.msra.mxu0 %v1099
  %1897 = vmatprep.subr.mxu0 0.0
  %1898 = vmatpush2.msra.mxu0 0.0
  %1899 = vmatprep.subr.mxu0 0.0
  %1900 = vmatpush2.msra.mxu0 0.0
  %1901 = vmatprep.subr.mxu0 0.0
  %1902 = vmatpush2.msra.mxu0 0.0
  %1903 = vmatprep.subr.mxu0 0.0
  %1904 = vmatpush2.msra.mxu0 0.0
  %1905 = vmatprep.subr.mxu0 0.0
  %1906 = vmatpush2.msra.mxu0 0.0
  %1907 = vmatprep.subr.mxu0 0.0
  %1908 = vmatpush2.msra.mxu0 0.0
  %1909 = vmatprep.subr.mxu0 0.0
  %1910 = vmatpush2.msra.mxu0 0.0
  %1911 = vmatprep.subr.mxu0 0.0
  %1912 = vmatpush2.msra.mxu0 0.0
  %1913 = vmatprep.subr.mxu0 0.0
  %1914 = vmatpush2.msra.mxu0 0.0
  %1915 = vmatprep.subr.mxu0 0.0
  %1916 = vmatpush2.msra.mxu0 0.0
  %1917 = vmatprep.subr.mxu0 0.0
  %1918 = vmatpush2.msra.mxu0 0.0
  %1919 = vmatprep.subr.mxu0 0.0
  %1920 = vmatpush2.msra.mxu0 0.0
  %1921 = vmatprep.subr.mxu0 0.0
  %1922 = vmatpush2.msra.mxu0 0.0
  %1923 = vmatprep.subr.mxu0 0.0
  %1924 = vmatpush2.msra.mxu0 0.0
  %1925 = vmatprep.subr.mxu0 0.0
  %1926 = vmatpush2.msra.mxu0 0.0
  %1927 = vmatprep.subr.mxu0 0.0
  %1928 = vmatpush2.msra.mxu0 0.0
  %1929 = vmatprep.mubr.f32.mxu0 0.0
  %1930 = vmatmul.mubr.f32.gmra.mxu0 %v1863
  %v1931 = vpop.f32.mrf.mxu0
  %v1932 = vadd.f32 0.0, %v1931
  %v1933 = vpop.f32.mrf.mxu0
  %1934 = vdwg.mxu0
  %v1936 = vrot.slane %v1932, 2
  %v1938 = vadd.f32 %v1096, %v1936
  %v1939 = vxor.u32 %v1938, 2147483648
  %v1940 = vmul.f32 %v1939, 1.442695
  %v1941 = vpow.pop %v1940
  %v1942 = vadd.f32 %v1941, 1.0
  %v1943 = vrcp.pop %v1942
  %v1944 = vmul.f32 1.0, %v1943
  %v1945 = vtanh.pop %v1938
  %v1947 = vrot.slane %v1848, 6
  %v1949 = vmul.f32 %v1944, %v1947
  %1951 = vrot.lane.b32.xlu0 %v1945, 32
  %v1952 = vpop.permute.xlu0 %1951
  %v1954 = vmul.f32 %v1944, %v1952
  %1956 = vrot.lane.b32.xlu0 %v1954, 32
  %v1957 = vpop.permute.xlu0 %1956
  %v1959 = vadd.f32 %v1949, %v1957
  %v1960 = vtanh.pop %v1959
  %1962 = vrot.lane.b32.xlu0 %v1960, 32
  %v1963 = vpop.permute.xlu0 %1962
  %v1965 = vmul.f32 %v1944, %v1963
  %1967 = vrot.lane.b32.xlu0 %v1965, 64
  %v1968 = vpop.permute.xlu0 %1967
  %1970 = vst.msk [vmem:[#allocation3 + $0x8] sm:$0xc0] %vm565, %v1968
  %v1971 = vld [vmem:[#allocation3] sm:$0xff]
  %v1972 = vld [vmem:[#allocation3 + $0x8] sm:$0xff]
  %v1973 = vld [vmem:[%s7] sm:$0xff]
  %v1974 = vld [vmem:[%s7 + $0x8] sm:$0xff]
  %v1975 = vld [vmem:[%s7 + $0x10] sm:$0xff]
  %v1976 = vld [vmem:[%s7 + $0x18] sm:$0xff]
  %v1977 = vld [vmem:[%s8] sm:$0x1]
  %v1979 = vlaneseq
  %v1980 = vshrl.u32 %v1979, 7
  %v1981 = vsub.s32 0, %v1980
  %v1982 = vrot.slane %v1977, %v1981
  %v1985 = vsel %vm129, %v1971, 0
  %v1988 = vsel %vm129, %v1972, 0
  %1990 = vmatprep.subr.mxu0 0.0
  %1991 = vmatpush1.msra.mxu0 0.0
  %1992 = vmatprep.subr.mxu0 0.0
  %1993 = vmatpush1.msra.mxu0 0.0
  %1994 = vmatprep.subr.mxu0 0.0
  %1995 = vmatpush1.msra.mxu0 0.0
  %1996 = vmatprep.subr.mxu0 0.0
  %1997 = vmatpush1.msra.mxu0 0.0
  %1998 = vmatprep.subr.mxu0 0.0
  %1999 = vmatpush1.msra.mxu0 0.0
  %2000 = vmatprep.subr.mxu0 0.0
  %2001 = vmatpush1.msra.mxu0 0.0
  %2002 = vmatprep.subr.mxu0 0.0
  %2003 = vmatpush1.msra.mxu0 0.0
  %2004 = vmatprep.subr.mxu0 0.0
  %2005 = vmatpush1.msra.mxu0 0.0
  %2006 = vmatprep.subr.mxu0 0.0
  %2007 = vmatpush1.msra.mxu0 0.0
  %2008 = vmatprep.subr.mxu0 0.0
  %2009 = vmatpush1.msra.mxu0 0.0
  %2010 = vmatprep.subr.mxu0 0.0
  %2011 = vmatpush1.msra.mxu0 0.0
  %2012 = vmatprep.subr.mxu0 0.0
  %2013 = vmatpush1.msra.mxu0 0.0
  %2014 = vmatprep.subr.mxu0 0.0
  %2015 = vmatpush1.msra.mxu0 %v1976
  %2016 = vmatprep.subr.mxu0 0.0
  %2017 = vmatpush1.msra.mxu0 %v1975
  %2018 = vmatprep.subr.mxu0 0.0
  %2019 = vmatpush1.msra.mxu0 %v1974
  %2020 = vmatprep.subr.mxu0 0.0
  %2021 = vmatpush1.msra.mxu0 %v1973
  %2022 = vmatprep.subr.mxu0 0.0
  %2023 = vmatpush2.msra.mxu0 0.0
  %2024 = vmatprep.subr.mxu0 0.0
  %2025 = vmatpush2.msra.mxu0 0.0
  %2026 = vmatprep.subr.mxu0 0.0
  %2027 = vmatpush2.msra.mxu0 0.0
  %2028 = vmatprep.subr.mxu0 0.0
  %2029 = vmatpush2.msra.mxu0 0.0
  %2030 = vmatprep.subr.mxu0 0.0
  %2031 = vmatpush2.msra.mxu0 0.0
  %2032 = vmatprep.subr.mxu0 0.0
  %2033 = vmatpush2.msra.mxu0 0.0
  %2034 = vmatprep.subr.mxu0 0.0
  %2035 = vmatpush2.msra.mxu0 0.0
  %2036 = vmatprep.subr.mxu0 0.0
  %2037 = vmatpush2.msra.mxu0 0.0
  %2038 = vmatprep.subr.mxu0 0.0
  %2039 = vmatpush2.msra.mxu0 0.0
  %2040 = vmatprep.subr.mxu0 0.0
  %2041 = vmatpush2.msra.mxu0 0.0
  %2042 = vmatprep.subr.mxu0 0.0
  %2043 = vmatpush2.msra.mxu0 0.0
  %2044 = vmatprep.subr.mxu0 0.0
  %2045 = vmatpush2.msra.mxu0 0.0
  %2046 = vmatprep.subr.mxu0 0.0
  %2047 = vmatpush2.msra.mxu0 0.0
  %2048 = vmatprep.subr.mxu0 0.0
  %2049 = vmatpush2.msra.mxu0 0.0
  %2050 = vmatprep.subr.mxu0 0.0
  %2051 = vmatpush2.msra.mxu0 0.0
  %2052 = vmatprep.subr.mxu0 0.0
  %2053 = vmatpush2.msra.mxu0 0.0
  %2054 = vmatprep.mubr.f32.mxu0 0.0
  %2055 = vmatmul.mubr.f32.gmra.mxu0 %v1985
  %v2056 = vpop.f32.mrf.mxu0
  %v2057 = vadd.f32 %v1982, %v2056
  %v2058 = vpop.f32.mrf.mxu0
  %2059 = vmatprep.mubr.f32.mxu0 0.0
  %2060 = vmatmul.mubr.f32.gmra.mxu0 %v1988
  %v2061 = vpop.f32.mrf.mxu0
  %v2062 = vadd.f32 %v1982, %v2061
  %v2063 = vpop.f32.mrf.mxu0
  %2064 = vdwg.mxu0
  %vm2065 = vcmask 64512
  %2066 = vst.msk [vmem:[%s9] sm:$0xff] %vm2065, %v2057
  %2067 = vst.msk [vmem:[%s9 + $0x8] sm:$0xff] %vm2065, %v2062
  // Predicated region
  $region38: #{lstm_classifier_forward.1} parent=0 // pred_check
    _
  $region39: #{lstm_classifier_forward.1} parent=0 // pred_check_branch
    %2069 = sbr.rel (0) target = $region41
  $region40: #{lstm_classifier_forward.1} parent=0 // pred_region
    _
  $region41: #{lstm_classifier_forward.1} parent=0 // pred_fallthru
    _
  // Predicated region
  $region42: #{lstm_classifier_forward.1} parent=0 // pred_check
    _
  $region43: #{lstm_classifier_forward.1} parent=0 // pred_check_branch
    %2071 = sbr.rel (0) target = $region45
  $region44: #{lstm_classifier_forward.1} parent=0 // pred_region
    _
  $region45: #{lstm_classifier_forward.1} parent=0 // pred_fallthru
    _

</llo_original>
